<compile_context>
chip_gen: v7x
topology: tpu7x:2x2x1
jax: 0.10.0
libtpu: 0.0.40
codegen_flags: <defaults>
</compile_context>

<pallas_src>
import functools

import jax
import jax.numpy as jnp
from jax import lax
from jax.experimental import pallas as pl
from jax.experimental.pallas import tpu as pltpu

EPS = 1e-5   # PyTorch GroupNorm default eps
OFF = 128    # lane offset of the data region inside the padded scratch


# ----------------------------- in-kernel helpers --------------------------- #

def _gn_relu(y, gamma, beta, G, eps):
    """GroupNorm (per-sample, biased variance) + affine + ReLU on y (C, HW)."""
    C, HW = y.shape
    gs = C // G
    inv = 1.0 / float(gs * HW)
    if G == 1:
        mean = jnp.sum(jnp.sum(y, axis=1, keepdims=True),
                       axis=0, keepdims=True) * inv                   # (1, 1)
        cen = y - mean                                                 # (C, HW)
        var = jnp.sum(jnp.sum(cen * cen, axis=1, keepdims=True),
                      axis=0, keepdims=True) * inv                     # (1, 1)
        scale = gamma * lax.rsqrt(var + eps)                           # (C, 1)
    else:
        yg = y.reshape(G, gs, HW)
        mean = jnp.sum(jnp.sum(yg, axis=2, keepdims=True),
                       axis=1, keepdims=True) * inv                    # (G,1,1)
        cen3 = yg - mean
        var = jnp.sum(jnp.sum(cen3 * cen3, axis=2, keepdims=True),
                      axis=1, keepdims=True) * inv                      # (G,1,1)
        rstd = jnp.broadcast_to(lax.rsqrt(var + eps), (G, gs, 1)).reshape(C, 1)
        cen = cen3.reshape(C, HW)
        scale = gamma * rstd                                            # (C, 1)
    return jnp.maximum(cen * scale + beta, 0.0)


def _resblock_kernel(x_ref, ws_ref, pp_ref, o_ref, xp_ref, p_ref,
                     *, H, W, G, eps):
    """Fused ResidualBlock forward for the whole (small) batch.

    x_ref : (N, C, HW)   raw flattened input (lane-dense NCHW)
    ws_ref: (2, C, 9*C)  packed conv1/conv2 weights, columns ordered (kh,kw,ci)
    pp_ref: (C, 6)       packed [b1, g1, be1, b2, g2, be2]
    o_ref : (N, C, HW)   output
    xp_ref: (C, Lseg)    VMEM scratch, vertically padded sample (reused for y1)
    p_ref : (9*C, HW)    VMEM scratch, stacked 3x3 taps (MXU LHS^T)
    """
    N, C, HW = o_ref.shape
    Lseg = xp_ref.shape[1]

    w1 = ws_ref[0]                       # (C, 9*C)
    w2 = ws_ref[1]
    b1 = pp_ref[:, 0:1]
    g1 = pp_ref[:, 1:2]
    be1 = pp_ref[:, 2:3]
    b2 = pp_ref[:, 3:4]
    g2 = pp_ref[:, 4:5]
    be2 = pp_ref[:, 5:6]

    # Column index of every flattened spatial position (horizontal masks).
    col = lax.rem(lax.broadcasted_iota(jnp.int32, (C, HW), 1), W)
    mask_l = col >= 1          # valid positions for dw = -1 taps (kw == 0)
    mask_r = col <= W - 2      # valid positions for dw = +1 taps (kw == 2)

    # Zero only the halo lanes, once: [0, OFF) and [OFF+HW, Lseg) (aligned
    # 128-lane chunks).  The data region [OFF, OFF+HW) is overwritten every
    # time it is used, so the halos stay valid across both convs and samples.
    xp_ref[:, 0:OFF] = jnp.zeros((C, OFF), jnp.float32)
    xp_ref[:, OFF + HW:Lseg] = jnp.zeros((C, Lseg - OFF - HW), jnp.float32)

    def conv3x3(w, b):
        # Write the 9 statically-shifted lane views of xp_ref into the
        # (9C, HW) patch scratch (sublane-group aligned stores), then one
        # K = 9C MXU matmul.
        idx = 0
        for kh in range(3):
            for kw in range(3):
                start = OFF + (kh - 1) * W + (kw - 1)
                t = xp_ref[:, start:start + HW]
                if kw == 0:
                    t = jnp.where(mask_l, t, 0.0)
                elif kw == 2:
                    t = jnp.where(mask_r, t, 0.0)
                p_ref[idx * C:(idx + 1) * C, :] = t
                idx += 1
        return jnp.dot(w, p_ref[...], preferred_element_type=jnp.float32) + b

    # Statically unrolled loop over the (tiny) batch — single grid step.
    for n in range(N):
        # ---- conv1 -> GroupNorm -> ReLU (never leaves VMEM/vregs) ----
        xp_ref[:, OFF:OFF + HW] = x_ref[n]              # aligned 256-lane store
        y1 = _gn_relu(conv3x3(w1, b1), g1, be1, G, eps)

        # ---- re-pad y1 in the SAME scratch (halos are still zero) ----
        xp_ref[:, OFF:OFF + HW] = y1                    # aligned 256-lane store

        # ---- conv2 -> GroupNorm -> ReLU -> residual add -> ReLU ----
        y2 = _gn_relu(conv3x3(w2, b2), g2, be2, G, eps)
        o_ref[n] = jnp.maximum(x_ref[n] + y2, 0.0)      # aligned residual load


# ------------------------------ JAX wrapper -------------------------------- #

def _weight_oihw_to_mat(w_oihw):
    """PyTorch (O, I, KH, KW) conv weight -> (O, KH*KW*I), columns (kh, kw, i)."""
    o, i, kh, kw = w_oihw.shape
    return jnp.transpose(w_oihw, (0, 2, 3, 1)).reshape(o, kh * kw * i)


def residual_block_pallas(x_nchw, raw, num_groups):
    """ResidualBlock forward (stride=1, GroupNorm).  x_nchw: (N, C, H, W) f32."""
    N, C_in, H, W = x_nchw.shape
    C = raw["w1"].shape[0]
    assert C_in == C, "stride=1 residual path requires in_planes == planes"
    assert C % 8 == 0, "channel count must be a multiple of 8 (sublane groups)"
    assert OFF >= W + 1, "data-start offset must cover the top halo"
    HW = H * W

    # Padded-scratch segment length: [0,OFF) halo | [OFF,OFF+HW) data | tail
    # halo (>= W+1 zero lanes), rounded up to a 128-lane multiple.
    Lseg = ((OFF + HW + W + 1 + 127) // 128) * 128

    # No host-side padding: just a contiguous (free) reshape to (N, C, HW).
    x_flat = x_nchw.reshape(N, C, HW)

    # Pack all weights / per-channel constants into two small operands.
    ws = jnp.stack([_weight_oihw_to_mat(raw["w1"]),
                    _weight_oihw_to_mat(raw["w2"])], axis=0)           # (2, C, 9C)
    pp = jnp.stack([raw["b1"], raw["g1"], raw["be1"],
                    raw["b2"], raw["g2"], raw["be2"]], axis=1)         # (C, 6)

    kernel = functools.partial(_resblock_kernel, H=H, W=W, G=num_groups, eps=EPS)
    out = pl.pallas_call(
        kernel,
        out_shape=jax.ShapeDtypeStruct((N, C, HW), jnp.float32),
        grid_spec=pltpu.PrefetchScalarGridSpec(
            num_scalar_prefetch=0,
            grid=(1,),                                   # single invocation
            in_specs=[
                pl.BlockSpec((N, C, HW), lambda i: (0, 0, 0)),
                pl.BlockSpec((2, C, 9 * C), lambda i: (0, 0, 0)),
                pl.BlockSpec((C, 6), lambda i: (0, 0)),
            ],
            out_specs=pl.BlockSpec((N, C, HW), lambda i: (0, 0, 0)),
            scratch_shapes=[
                pltpu.VMEM((C, Lseg), jnp.float32),      # padded x / padded y1
                pltpu.VMEM((9 * C, HW), jnp.float32),    # stacked 3x3 taps
            ],
        ),
        compiler_params=pltpu.CompilerParams(
            dimension_semantics=("arbitrary",)),
    )(x_flat, ws, pp)
    return out.reshape(N, C, H, W)


# --------------------------- pure-JAX reference ----------------------------- #

def _ref_conv3x3(x, w_oihw, b):
    y = lax.conv_general_dilated(x, w_oihw, window_strides=(1, 1),
                                 padding=((1, 1), (1, 1)),
                                 dimension_numbers=("NCHW", "OIHW", "NCHW"))
    return y + b.reshape(1, -1, 1, 1)


def _ref_group_norm(y, G, gamma, beta):
    N, C, H, W = y.shape
    yg = y.reshape(N, G, (C // G) * H * W)
    mean = yg.mean(axis=2, keepdims=True)
    var = yg.var(axis=2, keepdims=True)
    yn = (yg - mean) / jnp.sqrt(var + EPS)
    return yn.reshape(N, C, H, W) * gamma.reshape(1, C, 1, 1) + beta.reshape(1, C, 1, 1)


def residual_block_ref(x, raw, G):
    y = _ref_conv3x3(x, raw["w1"], raw["b1"])
    y = jnp.maximum(_ref_group_norm(y, G, raw["g1"], raw["be1"]), 0.0)
    y = _ref_conv3x3(y, raw["w2"], raw["b2"])
    y = jnp.maximum(_ref_group_norm(y, G, raw["g2"], raw["be2"]), 0.0)
    return jnp.maximum(x + y, 0.0)


# --------------------------------- main ------------------------------------ #

if __name__ == "__main__":
    # Module config: in_planes = planes = 8, norm_fn='group', stride=1
    # => num_groups = planes // 8 = 1, no downsample branch.
    N, H, W = 2, 16, 16
    in_planes = planes = 8
    num_groups = planes // 8

    key = jax.random.PRNGKey(0)
    ks = jax.random.split(key, 9)
    raw = {
        "w1": 0.1 * jax.random.normal(ks[0], (planes, in_planes, 3, 3), jnp.float32),
        "b1": 0.1 * jax.random.normal(ks[1], (planes,), jnp.float32),
        "w2": 0.1 * jax.random.normal(ks[2], (planes, planes, 3, 3), jnp.float32),
        "b2": 0.1 * jax.random.normal(ks[3], (planes,), jnp.float32),
        "g1": 1.0 + 0.1 * jax.random.normal(ks[4], (planes,), jnp.float32),
        "be1": 0.1 * jax.random.normal(ks[5], (planes,), jnp.float32),
        "g2": 1.0 + 0.1 * jax.random.normal(ks[6], (planes,), jnp.float32),
        "be2": 0.1 * jax.random.normal(ks[7], (planes,), jnp.float32),
    }
    # PyTorch-layout NCHW input (2, 8, 16, 16)
    x = jax.random.normal(ks[8], (N, in_planes, H, W), jnp.float32)

    out = jax.block_until_ready(residual_block_pallas(x, raw, num_groups))
    ref = residual_block_ref(x, raw, num_groups)

    assert out.shape == (N, planes, H, W)
    assert jnp.allclose(out, ref, atol=2e-3, rtol=2e-3), (
        "mismatch vs reference, max abs err = "
        f"{float(jnp.max(jnp.abs(out - ref)))}")

    print("KERNEL_OK")
</pallas_src>

<mosaic_0001>
module attributes {stable_mosaic.version = 11 : i64} {
  func.func @_resblock_kernel(%arg0: i32, %arg1: memref<2x8x256xf32, #tpu.memory_space<vmem>>, %arg2: memref<2x8x72xf32, #tpu.memory_space<vmem>>, %arg3: memref<8x6xf32, #tpu.memory_space<vmem>>, %arg4: memref<2x8x256xf32, #tpu.memory_space<vmem>>, %arg5: memref<8x512xf32, #tpu.memory_space<vmem>>, %arg6: memref<72x256xf32, #tpu.memory_space<vmem>>) attributes {dimension_semantics = [#tpu.dimension_semantics<arbitrary>], iteration_bounds = array<i64: 1>, scalar_prefetch = 0 : i64, scratch_operands = 2 : i64, tpu.core_type = #tpu.core_type<tc>, window_params = [{pipeline_mode = #tpu.pipeline_mode<synchronous>, transform_indices = @transform_0, window_bounds = array<i64: 2, 8, 256>}, {pipeline_mode = #tpu.pipeline_mode<synchronous>, transform_indices = @transform_1, window_bounds = array<i64: 2, 8, 72>}, {pipeline_mode = #tpu.pipeline_mode<synchronous>, transform_indices = @transform_2, window_bounds = array<i64: 8, 6>}, {pipeline_mode = #tpu.pipeline_mode<synchronous>, transform_indices = @transform_3, window_bounds = array<i64: 2, 8, 256>}]} {
    %c0 = arith.constant 0 : index
    %c0_0 = arith.constant 0 : index
    %c0_1 = arith.constant 0 : index
    %0 = vector.load %arg2[%c0, %c0_0, %c0_1] : memref<2x8x72xf32, #tpu.memory_space<vmem>>, vector<1x8x72xf32>
    %1 = vector.shape_cast %0 : vector<1x8x72xf32> to vector<8x72xf32>
    %c1 = arith.constant 1 : index
    %c0_2 = arith.constant 0 : index
    %c0_3 = arith.constant 0 : index
    %2 = vector.load %arg2[%c1, %c0_2, %c0_3] : memref<2x8x72xf32, #tpu.memory_space<vmem>>, vector<1x8x72xf32>
    %3 = vector.shape_cast %2 : vector<1x8x72xf32> to vector<8x72xf32>
    %c0_4 = arith.constant 0 : index
    %c0_5 = arith.constant 0 : index
    %4 = vector.load %arg3[%c0_4, %c0_5] : memref<8x6xf32, #tpu.memory_space<vmem>>, vector<8x1xf32>
    %c0_6 = arith.constant 0 : index
    %c1_7 = arith.constant 1 : index
    %5 = vector.load %arg3[%c0_6, %c1_7] : memref<8x6xf32, #tpu.memory_space<vmem>>, vector<8x1xf32>
    %c0_8 = arith.constant 0 : index
    %c2 = arith.constant 2 : index
    %6 = vector.load %arg3[%c0_8, %c2] : memref<8x6xf32, #tpu.memory_space<vmem>>, vector<8x1xf32>
    %c0_9 = arith.constant 0 : index
    %c3 = arith.constant 3 : index
    %7 = vector.load %arg3[%c0_9, %c3] : memref<8x6xf32, #tpu.memory_space<vmem>>, vector<8x1xf32>
    %c0_10 = arith.constant 0 : index
    %c4 = arith.constant 4 : index
    %8 = vector.load %arg3[%c0_10, %c4] : memref<8x6xf32, #tpu.memory_space<vmem>>, vector<8x1xf32>
    %c0_11 = arith.constant 0 : index
    %c5 = arith.constant 5 : index
    %9 = vector.load %arg3[%c0_11, %c5] : memref<8x6xf32, #tpu.memory_space<vmem>>, vector<8x1xf32>
    %10 = tpu.iota {dimensions = array<i32: 1>} : vector<8x256xi32>
    %c16_i32 = arith.constant 16 : i32
    %11 = vector.broadcast %c16_i32 : i32 to vector<8x256xi32>
    %12 = arith.remsi %10, %11 : vector<8x256xi32>
    %c1_i32 = arith.constant 1 : i32
    %13 = vector.broadcast %c1_i32 : i32 to vector<8x256xi32>
    %14 = arith.cmpi sge, %12, %13 : vector<8x256xi32>
    %c14_i32 = arith.constant 14 : i32
    %15 = vector.broadcast %c14_i32 : i32 to vector<8x256xi32>
    %16 = arith.cmpi sle, %12, %15 : vector<8x256xi32>
    %cst = arith.constant 0.000000e+00 : f32
    %17 = vector.broadcast %cst : f32 to vector<8x128xf32>
    %c0_12 = arith.constant 0 : index
    %c0_13 = arith.constant 0 : index
    %18 = vector.load %arg5[%c0_12, %c0_13] : memref<8x512xf32, #tpu.memory_space<vmem>>, vector<8x128xf32>
    tpu.vector_store %arg5[%c0_12, %c0_13], %17 {strides = array<i32>} : memref<8x512xf32, #tpu.memory_space<vmem>>, vector<8x128xf32>,
    %cst_14 = arith.constant 0.000000e+00 : f32
    %19 = vector.broadcast %cst_14 : f32 to vector<8x128xf32>
    %c0_15 = arith.constant 0 : index
    %c384 = arith.constant 384 : index
    %20 = vector.load %arg5[%c0_15, %c384] : memref<8x512xf32, #tpu.memory_space<vmem>>, vector<8x128xf32>
    tpu.vector_store %arg5[%c0_15, %c384], %19 {strides = array<i32>} : memref<8x512xf32, #tpu.memory_space<vmem>>, vector<8x128xf32>,
    %c0_16 = arith.constant 0 : index
    %c0_17 = arith.constant 0 : index
    %c0_18 = arith.constant 0 : index
    %21 = vector.load %arg1[%c0_16, %c0_17, %c0_18] : memref<2x8x256xf32, #tpu.memory_space<vmem>>, vector<1x8x256xf32>
    %22 = vector.shape_cast %21 : vector<1x8x256xf32> to vector<8x256xf32>
    %c0_19 = arith.constant 0 : index
    %c128 = arith.constant 128 : index
    %23 = vector.load %arg5[%c0_19, %c128] : memref<8x512xf32, #tpu.memory_space<vmem>>, vector<8x256xf32>
    tpu.vector_store %arg5[%c0_19, %c128], %22 {strides = array<i32>} : memref<8x512xf32, #tpu.memory_space<vmem>>, vector<8x256xf32>,
    %c0_20 = arith.constant 0 : index
    %c111 = arith.constant 111 : index
    %24 = vector.load %arg5[%c0_20, %c111] : memref<8x512xf32, #tpu.memory_space<vmem>>, vector<8x256xf32>
    %cst_21 = arith.constant 0.000000e+00 : f32
    %25 = vector.broadcast %cst_21 : f32 to vector<8x256xf32>
    %26 = arith.select %14, %24, %25 : vector<8x256xi1>, vector<8x256xf32>
    %c0_22 = arith.constant 0 : index
    %c0_23 = arith.constant 0 : index
    %27 = vector.load %arg6[%c0_22, %c0_23] : memref<72x256xf32, #tpu.memory_space<vmem>>, vector<8x256xf32>
    tpu.vector_store %arg6[%c0_22, %c0_23], %26 {strides = array<i32>} : memref<72x256xf32, #tpu.memory_space<vmem>>, vector<8x256xf32>,
    %c0_24 = arith.constant 0 : index
    %c112 = arith.constant 112 : index
    %28 = vector.load %arg5[%c0_24, %c112] : memref<8x512xf32, #tpu.memory_space<vmem>>, vector<8x256xf32>
    %c8 = arith.constant 8 : index
    %c0_25 = arith.constant 0 : index
    %29 = vector.load %arg6[%c8, %c0_25] : memref<72x256xf32, #tpu.memory_space<vmem>>, vector<8x256xf32>
    tpu.vector_store %arg6[%c8, %c0_25], %28 {strides = array<i32>} : memref<72x256xf32, #tpu.memory_space<vmem>>, vector<8x256xf32>,
    %c0_26 = arith.constant 0 : index
    %c113 = arith.constant 113 : index
    %30 = vector.load %arg5[%c0_26, %c113] : memref<8x512xf32, #tpu.memory_space<vmem>>, vector<8x256xf32>
    %cst_27 = arith.constant 0.000000e+00 : f32
    %31 = vector.broadcast %cst_27 : f32 to vector<8x256xf32>
    %32 = arith.select %16, %30, %31 : vector<8x256xi1>, vector<8x256xf32>
    %c16 = arith.constant 16 : index
    %c0_28 = arith.constant 0 : index
    %33 = vector.load %arg6[%c16, %c0_28] : memref<72x256xf32, #tpu.memory_space<vmem>>, vector<8x256xf32>
    tpu.vector_store %arg6[%c16, %c0_28], %32 {strides = array<i32>} : memref<72x256xf32, #tpu.memory_space<vmem>>, vector<8x256xf32>,
    %c0_29 = arith.constant 0 : index
    %c127 = arith.constant 127 : index
    %34 = vector.load %arg5[%c0_29, %c127] : memref<8x512xf32, #tpu.memory_space<vmem>>, vector<8x256xf32>
    %cst_30 = arith.constant 0.000000e+00 : f32
    %35 = vector.broadcast %cst_30 : f32 to vector<8x256xf32>
    %36 = arith.select %14, %34, %35 : vector<8x256xi1>, vector<8x256xf32>
    %c24 = arith.constant 24 : index
    %c0_31 = arith.constant 0 : index
    %37 = vector.load %arg6[%c24, %c0_31] : memref<72x256xf32, #tpu.memory_space<vmem>>, vector<8x256xf32>
    tpu.vector_store %arg6[%c24, %c0_31], %36 {strides = array<i32>} : memref<72x256xf32, #tpu.memory_space<vmem>>, vector<8x256xf32>,
    %c0_32 = arith.constant 0 : index
    %c128_33 = arith.constant 128 : index
    %38 = vector.load %arg5[%c0_32, %c128_33] : memref<8x512xf32, #tpu.memory_space<vmem>>, vector<8x256xf32>
    %c32 = arith.constant 32 : index
    %c0_34 = arith.constant 0 : index
    %39 = vector.load %arg6[%c32, %c0_34] : memref<72x256xf32, #tpu.memory_space<vmem>>, vector<8x256xf32>
    tpu.vector_store %arg6[%c32, %c0_34], %38 {strides = array<i32>} : memref<72x256xf32, #tpu.memory_space<vmem>>, vector<8x256xf32>,
    %c0_35 = arith.constant 0 : index
    %c129 = arith.constant 129 : index
    %40 = vector.load %arg5[%c0_35, %c129] : memref<8x512xf32, #tpu.memory_space<vmem>>, vector<8x256xf32>
    %cst_36 = arith.constant 0.000000e+00 : f32
    %41 = vector.broadcast %cst_36 : f32 to vector<8x256xf32>
    %42 = arith.select %16, %40, %41 : vector<8x256xi1>, vector<8x256xf32>
    %c40 = arith.constant 40 : index
    %c0_37 = arith.constant 0 : index
    %43 = vector.load %arg6[%c40, %c0_37] : memref<72x256xf32, #tpu.memory_space<vmem>>, vector<8x256xf32>
    tpu.vector_store %arg6[%c40, %c0_37], %42 {strides = array<i32>} : memref<72x256xf32, #tpu.memory_space<vmem>>, vector<8x256xf32>,
    %c0_38 = arith.constant 0 : index
    %c143 = arith.constant 143 : index
    %44 = vector.load %arg5[%c0_38, %c143] : memref<8x512xf32, #tpu.memory_space<vmem>>, vector<8x256xf32>
    %cst_39 = arith.constant 0.000000e+00 : f32
    %45 = vector.broadcast %cst_39 : f32 to vector<8x256xf32>
    %46 = arith.select %14, %44, %45 : vector<8x256xi1>, vector<8x256xf32>
    %c48 = arith.constant 48 : index
    %c0_40 = arith.constant 0 : index
    %47 = vector.load %arg6[%c48, %c0_40] : memref<72x256xf32, #tpu.memory_space<vmem>>, vector<8x256xf32>
    tpu.vector_store %arg6[%c48, %c0_40], %46 {strides = array<i32>} : memref<72x256xf32, #tpu.memory_space<vmem>>, vector<8x256xf32>,
    %c0_41 = arith.constant 0 : index
    %c144 = arith.constant 144 : index
    %48 = vector.load %arg5[%c0_41, %c144] : memref<8x512xf32, #tpu.memory_space<vmem>>, vector<8x256xf32>
    %c56 = arith.constant 56 : index
    %c0_42 = arith.constant 0 : index
    %49 = vector.load %arg6[%c56, %c0_42] : memref<72x256xf32, #tpu.memory_space<vmem>>, vector<8x256xf32>
    tpu.vector_store %arg6[%c56, %c0_42], %48 {strides = array<i32>} : memref<72x256xf32, #tpu.memory_space<vmem>>, vector<8x256xf32>,
    %c0_43 = arith.constant 0 : index
    %c145 = arith.constant 145 : index
    %50 = vector.load %arg5[%c0_43, %c145] : memref<8x512xf32, #tpu.memory_space<vmem>>, vector<8x256xf32>
    %cst_44 = arith.constant 0.000000e+00 : f32
    %51 = vector.broadcast %cst_44 : f32 to vector<8x256xf32>
    %52 = arith.select %16, %50, %51 : vector<8x256xi1>, vector<8x256xf32>
    %c64 = arith.constant 64 : index
    %c0_45 = arith.constant 0 : index
    %53 = vector.load %arg6[%c64, %c0_45] : memref<72x256xf32, #tpu.memory_space<vmem>>, vector<8x256xf32>
    tpu.vector_store %arg6[%c64, %c0_45], %52 {strides = array<i32>} : memref<72x256xf32, #tpu.memory_space<vmem>>, vector<8x256xf32>,
    %c0_46 = arith.constant 0 : index
    %c0_47 = arith.constant 0 : index
    %54 = vector.load %arg6[%c0_46, %c0_47] : memref<72x256xf32, #tpu.memory_space<vmem>>, vector<72x256xf32>
    %cst_48 = arith.constant dense<0.000000e+00> : vector<8x256xf32>
    %55 = tpu.matmul %1, %54, %cst_48 {dimension_numbers = #tpu.dot_dimension_numbers<[1], [0], [0], [1], [0, 0, 1, 1], [], []>} : vector<8x72xf32>, vector<72x256xf32>, vector<8x256xf32> -> vector<8x256xf32>
    %56 = vector.broadcast %4 : vector<8x1xf32> to vector<8x256xf32>
    %57 = arith.addf %55, %56 : vector<8x256xf32>
    %cst_49 = arith.constant dense<0.000000e+00> : vector<8xf32>
    %58 = vector.multi_reduction <add>, %57, %cst_49 [1] : vector<8x256xf32> to vector<8xf32>
    %59 = vector.shape_cast %58 : vector<8xf32> to vector<8x1xf32>
    %cst_50 = arith.constant dense<0.000000e+00> : vector<1xf32>
    %60 = vector.multi_reduction <add>, %59, %cst_50 [0] : vector<8x1xf32> to vector<1xf32>
    %61 = vector.shape_cast %60 : vector<1xf32> to vector<1x1xf32>
    %cst_51 = arith.constant 4.8828125E-4 : f32
    %62 = vector.broadcast %cst_51 : f32 to vector<1x1xf32>
    %63 = arith.mulf %61, %62 : vector<1x1xf32>
    %64 = vector.broadcast %63 : vector<1x1xf32> to vector<8x256xf32>
    %65 = arith.subf %57, %64 : vector<8x256xf32>
    %66 = arith.mulf %65, %65 : vector<8x256xf32>
    %cst_52 = arith.constant dense<0.000000e+00> : vector<8xf32>
    %67 = vector.multi_reduction <add>, %66, %cst_52 [1] : vector<8x256xf32> to vector<8xf32>
    %68 = vector.shape_cast %67 : vector<8xf32> to vector<8x1xf32>
    %cst_53 = arith.constant dense<0.000000e+00> : vector<1xf32>
    %69 = vector.multi_reduction <add>, %68, %cst_53 [0] : vector<8x1xf32> to vector<1xf32>
    %70 = vector.shape_cast %69 : vector<1xf32> to vector<1x1xf32>
    %cst_54 = arith.constant 4.8828125E-4 : f32
    %71 = vector.broadcast %cst_54 : f32 to vector<1x1xf32>
    %72 = arith.mulf %70, %71 : vector<1x1xf32>
    %cst_55 = arith.constant 9.99999974E-6 : f32
    %73 = vector.broadcast %cst_55 : f32 to vector<1x1xf32>
    %74 = arith.addf %72, %73 : vector<1x1xf32>
    %75 = math.rsqrt %74 : vector<1x1xf32>
    %76 = vector.broadcast %75 : vector<1x1xf32> to vector<8x1xf32>
    %77 = arith.mulf %5, %76 : vector<8x1xf32>
    %78 = vector.broadcast %77 : vector<8x1xf32> to vector<8x256xf32>
    %79 = arith.mulf %65, %78 : vector<8x256xf32>
    %80 = vector.broadcast %6 : vector<8x1xf32> to vector<8x256xf32>
    %81 = arith.addf %79, %80 : vector<8x256xf32>
    %cst_56 = arith.constant 0.000000e+00 : f32
    %82 = vector.broadcast %cst_56 : f32 to vector<8x256xf32>
    %83 = arith.maximumf %81, %82 : vector<8x256xf32>
    %c0_57 = arith.constant 0 : index
    %c128_58 = arith.constant 128 : index
    %84 = vector.load %arg5[%c0_57, %c128_58] : memref<8x512xf32, #tpu.memory_space<vmem>>, vector<8x256xf32>
    tpu.vector_store %arg5[%c0_57, %c128_58], %83 {strides = array<i32>} : memref<8x512xf32, #tpu.memory_space<vmem>>, vector<8x256xf32>,
    %c0_59 = arith.constant 0 : index
    %c111_60 = arith.constant 111 : index
    %85 = vector.load %arg5[%c0_59, %c111_60] : memref<8x512xf32, #tpu.memory_space<vmem>>, vector<8x256xf32>
    %cst_61 = arith.constant 0.000000e+00 : f32
    %86 = vector.broadcast %cst_61 : f32 to vector<8x256xf32>
    %87 = arith.select %14, %85, %86 : vector<8x256xi1>, vector<8x256xf32>
    %c0_62 = arith.constant 0 : index
    %c0_63 = arith.constant 0 : index
    %88 = vector.load %arg6[%c0_62, %c0_63] : memref<72x256xf32, #tpu.memory_space<vmem>>, vector<8x256xf32>
    tpu.vector_store %arg6[%c0_62, %c0_63], %87 {strides = array<i32>} : memref<72x256xf32, #tpu.memory_space<vmem>>, vector<8x256xf32>,
    %c0_64 = arith.constant 0 : index
    %c112_65 = arith.constant 112 : index
    %89 = vector.load %arg5[%c0_64, %c112_65] : memref<8x512xf32, #tpu.memory_space<vmem>>, vector<8x256xf32>
    %c8_66 = arith.constant 8 : index
    %c0_67 = arith.constant 0 : index
    %90 = vector.load %arg6[%c8_66, %c0_67] : memref<72x256xf32, #tpu.memory_space<vmem>>, vector<8x256xf32>
    tpu.vector_store %arg6[%c8_66, %c0_67], %89 {strides = array<i32>} : memref<72x256xf32, #tpu.memory_space<vmem>>, vector<8x256xf32>,
    %c0_68 = arith.constant 0 : index
    %c113_69 = arith.constant 113 : index
    %91 = vector.load %arg5[%c0_68, %c113_69] : memref<8x512xf32, #tpu.memory_space<vmem>>, vector<8x256xf32>
    %cst_70 = arith.constant 0.000000e+00 : f32
    %92 = vector.broadcast %cst_70 : f32 to vector<8x256xf32>
    %93 = arith.select %16, %91, %92 : vector<8x256xi1>, vector<8x256xf32>
    %c16_71 = arith.constant 16 : index
    %c0_72 = arith.constant 0 : index
    %94 = vector.load %arg6[%c16_71, %c0_72] : memref<72x256xf32, #tpu.memory_space<vmem>>, vector<8x256xf32>
    tpu.vector_store %arg6[%c16_71, %c0_72], %93 {strides = array<i32>} : memref<72x256xf32, #tpu.memory_space<vmem>>, vector<8x256xf32>,
    %c0_73 = arith.constant 0 : index
    %c127_74 = arith.constant 127 : index
    %95 = vector.load %arg5[%c0_73, %c127_74] : memref<8x512xf32, #tpu.memory_space<vmem>>, vector<8x256xf32>
    %cst_75 = arith.constant 0.000000e+00 : f32
    %96 = vector.broadcast %cst_75 : f32 to vector<8x256xf32>
    %97 = arith.select %14, %95, %96 : vector<8x256xi1>, vector<8x256xf32>
    %c24_76 = arith.constant 24 : index
    %c0_77 = arith.constant 0 : index
    %98 = vector.load %arg6[%c24_76, %c0_77] : memref<72x256xf32, #tpu.memory_space<vmem>>, vector<8x256xf32>
    tpu.vector_store %arg6[%c24_76, %c0_77], %97 {strides = array<i32>} : memref<72x256xf32, #tpu.memory_space<vmem>>, vector<8x256xf32>,
    %c0_78 = arith.constant 0 : index
    %c128_79 = arith.constant 128 : index
    %99 = vector.load %arg5[%c0_78, %c128_79] : memref<8x512xf32, #tpu.memory_space<vmem>>, vector<8x256xf32>
    %c32_80 = arith.constant 32 : index
    %c0_81 = arith.constant 0 : index
    %100 = vector.load %arg6[%c32_80, %c0_81] : memref<72x256xf32, #tpu.memory_space<vmem>>, vector<8x256xf32>
    tpu.vector_store %arg6[%c32_80, %c0_81], %99 {strides = array<i32>} : memref<72x256xf32, #tpu.memory_space<vmem>>, vector<8x256xf32>,
    %c0_82 = arith.constant 0 : index
    %c129_83 = arith.constant 129 : index
    %101 = vector.load %arg5[%c0_82, %c129_83] : memref<8x512xf32, #tpu.memory_space<vmem>>, vector<8x256xf32>
    %cst_84 = arith.constant 0.000000e+00 : f32
    %102 = vector.broadcast %cst_84 : f32 to vector<8x256xf32>
    %103 = arith.select %16, %101, %102 : vector<8x256xi1>, vector<8x256xf32>
    %c40_85 = arith.constant 40 : index
    %c0_86 = arith.constant 0 : index
    %104 = vector.load %arg6[%c40_85, %c0_86] : memref<72x256xf32, #tpu.memory_space<vmem>>, vector<8x256xf32>
    tpu.vector_store %arg6[%c40_85, %c0_86], %103 {strides = array<i32>} : memref<72x256xf32, #tpu.memory_space<vmem>>, vector<8x256xf32>,
    %c0_87 = arith.constant 0 : index
    %c143_88 = arith.constant 143 : index
    %105 = vector.load %arg5[%c0_87, %c143_88] : memref<8x512xf32, #tpu.memory_space<vmem>>, vector<8x256xf32>
    %cst_89 = arith.constant 0.000000e+00 : f32
    %106 = vector.broadcast %cst_89 : f32 to vector<8x256xf32>
    %107 = arith.select %14, %105, %106 : vector<8x256xi1>, vector<8x256xf32>
    %c48_90 = arith.constant 48 : index
    %c0_91 = arith.constant 0 : index
    %108 = vector.load %arg6[%c48_90, %c0_91] : memref<72x256xf32, #tpu.memory_space<vmem>>, vector<8x256xf32>
    tpu.vector_store %arg6[%c48_90, %c0_91], %107 {strides = array<i32>} : memref<72x256xf32, #tpu.memory_space<vmem>>, vector<8x256xf32>,
    %c0_92 = arith.constant 0 : index
    %c144_93 = arith.constant 144 : index
    %109 = vector.load %arg5[%c0_92, %c144_93] : memref<8x512xf32, #tpu.memory_space<vmem>>, vector<8x256xf32>
    %c56_94 = arith.constant 56 : index
    %c0_95 = arith.constant 0 : index
    %110 = vector.load %arg6[%c56_94, %c0_95] : memref<72x256xf32, #tpu.memory_space<vmem>>, vector<8x256xf32>
    tpu.vector_store %arg6[%c56_94, %c0_95], %109 {strides = array<i32>} : memref<72x256xf32, #tpu.memory_space<vmem>>, vector<8x256xf32>,
    %c0_96 = arith.constant 0 : index
    %c145_97 = arith.constant 145 : index
    %111 = vector.load %arg5[%c0_96, %c145_97] : memref<8x512xf32, #tpu.memory_space<vmem>>, vector<8x256xf32>
    %cst_98 = arith.constant 0.000000e+00 : f32
    %112 = vector.broadcast %cst_98 : f32 to vector<8x256xf32>
    %113 = arith.select %16, %111, %112 : vector<8x256xi1>, vector<8x256xf32>
    %c64_99 = arith.constant 64 : index
    %c0_100 = arith.constant 0 : index
    %114 = vector.load %arg6[%c64_99, %c0_100] : memref<72x256xf32, #tpu.memory_space<vmem>>, vector<8x256xf32>
    tpu.vector_store %arg6[%c64_99, %c0_100], %113 {strides = array<i32>} : memref<72x256xf32, #tpu.memory_space<vmem>>, vector<8x256xf32>,
    %c0_101 = arith.constant 0 : index
    %c0_102 = arith.constant 0 : index
    %115 = vector.load %arg6[%c0_101, %c0_102] : memref<72x256xf32, #tpu.memory_space<vmem>>, vector<72x256xf32>
    %cst_103 = arith.constant dense<0.000000e+00> : vector<8x256xf32>
    %116 = tpu.matmul %3, %115, %cst_103 {dimension_numbers = #tpu.dot_dimension_numbers<[1], [0], [0], [1], [0, 0, 1, 1], [], []>} : vector<8x72xf32>, vector<72x256xf32>, vector<8x256xf32> -> vector<8x256xf32>
    %117 = vector.broadcast %7 : vector<8x1xf32> to vector<8x256xf32>
    %118 = arith.addf %116, %117 : vector<8x256xf32>
    %cst_104 = arith.constant dense<0.000000e+00> : vector<8xf32>
    %119 = vector.multi_reduction <add>, %118, %cst_104 [1] : vector<8x256xf32> to vector<8xf32>
    %120 = vector.shape_cast %119 : vector<8xf32> to vector<8x1xf32>
    %cst_105 = arith.constant dense<0.000000e+00> : vector<1xf32>
    %121 = vector.multi_reduction <add>, %120, %cst_105 [0] : vector<8x1xf32> to vector<1xf32>
    %122 = vector.shape_cast %121 : vector<1xf32> to vector<1x1xf32>
    %cst_106 = arith.constant 4.8828125E-4 : f32
    %123 = vector.broadcast %cst_106 : f32 to vector<1x1xf32>
    %124 = arith.mulf %122, %123 : vector<1x1xf32>
    %125 = vector.broadcast %124 : vector<1x1xf32> to vector<8x256xf32>
    %126 = arith.subf %118, %125 : vector<8x256xf32>
    %127 = arith.mulf %126, %126 : vector<8x256xf32>
    %cst_107 = arith.constant dense<0.000000e+00> : vector<8xf32>
    %128 = vector.multi_reduction <add>, %127, %cst_107 [1] : vector<8x256xf32> to vector<8xf32>
    %129 = vector.shape_cast %128 : vector<8xf32> to vector<8x1xf32>
    %cst_108 = arith.constant dense<0.000000e+00> : vector<1xf32>
    %130 = vector.multi_reduction <add>, %129, %cst_108 [0] : vector<8x1xf32> to vector<1xf32>
    %131 = vector.shape_cast %130 : vector<1xf32> to vector<1x1xf32>
    %cst_109 = arith.constant 4.8828125E-4 : f32
    %132 = vector.broadcast %cst_109 : f32 to vector<1x1xf32>
    %133 = arith.mulf %131, %132 : vector<1x1xf32>
    %cst_110 = arith.constant 9.99999974E-6 : f32
    %134 = vector.broadcast %cst_110 : f32 to vector<1x1xf32>
    %135 = arith.addf %133, %134 : vector<1x1xf32>
    %136 = math.rsqrt %135 : vector<1x1xf32>
    %137 = vector.broadcast %136 : vector<1x1xf32> to vector<8x1xf32>
    %138 = arith.mulf %8, %137 : vector<8x1xf32>
    %139 = vector.broadcast %138 : vector<8x1xf32> to vector<8x256xf32>
    %140 = arith.mulf %126, %139 : vector<8x256xf32>
    %141 = vector.broadcast %9 : vector<8x1xf32> to vector<8x256xf32>
    %142 = arith.addf %140, %141 : vector<8x256xf32>
    %cst_111 = arith.constant 0.000000e+00 : f32
    %143 = vector.broadcast %cst_111 : f32 to vector<8x256xf32>
    %144 = arith.maximumf %142, %143 : vector<8x256xf32>
    %c0_112 = arith.constant 0 : index
    %c0_113 = arith.constant 0 : index
    %c0_114 = arith.constant 0 : index
    %145 = vector.load %arg1[%c0_112, %c0_113, %c0_114] : memref<2x8x256xf32, #tpu.memory_space<vmem>>, vector<1x8x256xf32>
    %146 = vector.shape_cast %145 : vector<1x8x256xf32> to vector<8x256xf32>
    %147 = arith.addf %146, %144 : vector<8x256xf32>
    %cst_115 = arith.constant 0.000000e+00 : f32
    %148 = vector.broadcast %cst_115 : f32 to vector<8x256xf32>
    %149 = arith.maximumf %147, %148 : vector<8x256xf32>
    %c0_116 = arith.constant 0 : index
    %c0_117 = arith.constant 0 : index
    %c0_118 = arith.constant 0 : index
    %150 = vector.load %arg4[%c0_116, %c0_117, %c0_118] : memref<2x8x256xf32, #tpu.memory_space<vmem>>, vector<1x8x256xf32>
    %151 = vector.shape_cast %150 : vector<1x8x256xf32> to vector<8x256xf32>
    %152 = vector.shape_cast %149 : vector<8x256xf32> to vector<1x8x256xf32>
    tpu.vector_store %arg4[%c0_116, %c0_117, %c0_118], %152 {strides = array<i32>} : memref<2x8x256xf32, #tpu.memory_space<vmem>>, vector<1x8x256xf32>,
    %c1_119 = arith.constant 1 : index
    %c0_120 = arith.constant 0 : index
    %c0_121 = arith.constant 0 : index
    %153 = vector.load %arg1[%c1_119, %c0_120, %c0_121] : memref<2x8x256xf32, #tpu.memory_space<vmem>>, vector<1x8x256xf32>
    %154 = vector.shape_cast %153 : vector<1x8x256xf32> to vector<8x256xf32>
    %c0_122 = arith.constant 0 : index
    %c128_123 = arith.constant 128 : index
    %155 = vector.load %arg5[%c0_122, %c128_123] : memref<8x512xf32, #tpu.memory_space<vmem>>, vector<8x256xf32>
    tpu.vector_store %arg5[%c0_122, %c128_123], %154 {strides = array<i32>} : memref<8x512xf32, #tpu.memory_space<vmem>>, vector<8x256xf32>,
    %c0_124 = arith.constant 0 : index
    %c111_125 = arith.constant 111 : index
    %156 = vector.load %arg5[%c0_124, %c111_125] : memref<8x512xf32, #tpu.memory_space<vmem>>, vector<8x256xf32>
    %cst_126 = arith.constant 0.000000e+00 : f32
    %157 = vector.broadcast %cst_126 : f32 to vector<8x256xf32>
    %158 = arith.select %14, %156, %157 : vector<8x256xi1>, vector<8x256xf32>
    %c0_127 = arith.constant 0 : index
    %c0_128 = arith.constant 0 : index
    %159 = vector.load %arg6[%c0_127, %c0_128] : memref<72x256xf32, #tpu.memory_space<vmem>>, vector<8x256xf32>
    tpu.vector_store %arg6[%c0_127, %c0_128], %158 {strides = array<i32>} : memref<72x256xf32, #tpu.memory_space<vmem>>, vector<8x256xf32>,
    %c0_129 = arith.constant 0 : index
    %c112_130 = arith.constant 112 : index
    %160 = vector.load %arg5[%c0_129, %c112_130] : memref<8x512xf32, #tpu.memory_space<vmem>>, vector<8x256xf32>
    %c8_131 = arith.constant 8 : index
    %c0_132 = arith.constant 0 : index
    %161 = vector.load %arg6[%c8_131, %c0_132] : memref<72x256xf32, #tpu.memory_space<vmem>>, vector<8x256xf32>
    tpu.vector_store %arg6[%c8_131, %c0_132], %160 {strides = array<i32>} : memref<72x256xf32, #tpu.memory_space<vmem>>, vector<8x256xf32>,
    %c0_133 = arith.constant 0 : index
    %c113_134 = arith.constant 113 : index
    %162 = vector.load %arg5[%c0_133, %c113_134] : memref<8x512xf32, #tpu.memory_space<vmem>>, vector<8x256xf32>
    %cst_135 = arith.constant 0.000000e+00 : f32
    %163 = vector.broadcast %cst_135 : f32 to vector<8x256xf32>
    %164 = arith.select %16, %162, %163 : vector<8x256xi1>, vector<8x256xf32>
    %c16_136 = arith.constant 16 : index
    %c0_137 = arith.constant 0 : index
    %165 = vector.load %arg6[%c16_136, %c0_137] : memref<72x256xf32, #tpu.memory_space<vmem>>, vector<8x256xf32>
    tpu.vector_store %arg6[%c16_136, %c0_137], %164 {strides = array<i32>} : memref<72x256xf32, #tpu.memory_space<vmem>>, vector<8x256xf32>,
    %c0_138 = arith.constant 0 : index
    %c127_139 = arith.constant 127 : index
    %166 = vector.load %arg5[%c0_138, %c127_139] : memref<8x512xf32, #tpu.memory_space<vmem>>, vector<8x256xf32>
    %cst_140 = arith.constant 0.000000e+00 : f32
    %167 = vector.broadcast %cst_140 : f32 to vector<8x256xf32>
    %168 = arith.select %14, %166, %167 : vector<8x256xi1>, vector<8x256xf32>
    %c24_141 = arith.constant 24 : index
    %c0_142 = arith.constant 0 : index
    %169 = vector.load %arg6[%c24_141, %c0_142] : memref<72x256xf32, #tpu.memory_space<vmem>>, vector<8x256xf32>
    tpu.vector_store %arg6[%c24_141, %c0_142], %168 {strides = array<i32>} : memref<72x256xf32, #tpu.memory_space<vmem>>, vector<8x256xf32>,
    %c0_143 = arith.constant 0 : index
    %c128_144 = arith.constant 128 : index
    %170 = vector.load %arg5[%c0_143, %c128_144] : memref<8x512xf32, #tpu.memory_space<vmem>>, vector<8x256xf32>
    %c32_145 = arith.constant 32 : index
    %c0_146 = arith.constant 0 : index
    %171 = vector.load %arg6[%c32_145, %c0_146] : memref<72x256xf32, #tpu.memory_space<vmem>>, vector<8x256xf32>
    tpu.vector_store %arg6[%c32_145, %c0_146], %170 {strides = array<i32>} : memref<72x256xf32, #tpu.memory_space<vmem>>, vector<8x256xf32>,
    %c0_147 = arith.constant 0 : index
    %c129_148 = arith.constant 129 : index
    %172 = vector.load %arg5[%c0_147, %c129_148] : memref<8x512xf32, #tpu.memory_space<vmem>>, vector<8x256xf32>
    %cst_149 = arith.constant 0.000000e+00 : f32
    %173 = vector.broadcast %cst_149 : f32 to vector<8x256xf32>
    %174 = arith.select %16, %172, %173 : vector<8x256xi1>, vector<8x256xf32>
    %c40_150 = arith.constant 40 : index
    %c0_151 = arith.constant 0 : index
    %175 = vector.load %arg6[%c40_150, %c0_151] : memref<72x256xf32, #tpu.memory_space<vmem>>, vector<8x256xf32>
    tpu.vector_store %arg6[%c40_150, %c0_151], %174 {strides = array<i32>} : memref<72x256xf32, #tpu.memory_space<vmem>>, vector<8x256xf32>,
    %c0_152 = arith.constant 0 : index
    %c143_153 = arith.constant 143 : index
    %176 = vector.load %arg5[%c0_152, %c143_153] : memref<8x512xf32, #tpu.memory_space<vmem>>, vector<8x256xf32>
    %cst_154 = arith.constant 0.000000e+00 : f32
    %177 = vector.broadcast %cst_154 : f32 to vector<8x256xf32>
    %178 = arith.select %14, %176, %177 : vector<8x256xi1>, vector<8x256xf32>
    %c48_155 = arith.constant 48 : index
    %c0_156 = arith.constant 0 : index
    %179 = vector.load %arg6[%c48_155, %c0_156] : memref<72x256xf32, #tpu.memory_space<vmem>>, vector<8x256xf32>
    tpu.vector_store %arg6[%c48_155, %c0_156], %178 {strides = array<i32>} : memref<72x256xf32, #tpu.memory_space<vmem>>, vector<8x256xf32>,
    %c0_157 = arith.constant 0 : index
    %c144_158 = arith.constant 144 : index
    %180 = vector.load %arg5[%c0_157, %c144_158] : memref<8x512xf32, #tpu.memory_space<vmem>>, vector<8x256xf32>
    %c56_159 = arith.constant 56 : index
    %c0_160 = arith.constant 0 : index
    %181 = vector.load %arg6[%c56_159, %c0_160] : memref<72x256xf32, #tpu.memory_space<vmem>>, vector<8x256xf32>
    tpu.vector_store %arg6[%c56_159, %c0_160], %180 {strides = array<i32>} : memref<72x256xf32, #tpu.memory_space<vmem>>, vector<8x256xf32>,
    %c0_161 = arith.constant 0 : index
    %c145_162 = arith.constant 145 : index
    %182 = vector.load %arg5[%c0_161, %c145_162] : memref<8x512xf32, #tpu.memory_space<vmem>>, vector<8x256xf32>
    %cst_163 = arith.constant 0.000000e+00 : f32
    %183 = vector.broadcast %cst_163 : f32 to vector<8x256xf32>
    %184 = arith.select %16, %182, %183 : vector<8x256xi1>, vector<8x256xf32>
    %c64_164 = arith.constant 64 : index
    %c0_165 = arith.constant 0 : index
    %185 = vector.load %arg6[%c64_164, %c0_165] : memref<72x256xf32, #tpu.memory_space<vmem>>, vector<8x256xf32>
    tpu.vector_store %arg6[%c64_164, %c0_165], %184 {strides = array<i32>} : memref<72x256xf32, #tpu.memory_space<vmem>>, vector<8x256xf32>,
    %c0_166 = arith.constant 0 : index
    %c0_167 = arith.constant 0 : index
    %186 = vector.load %arg6[%c0_166, %c0_167] : memref<72x256xf32, #tpu.memory_space<vmem>>, vector<72x256xf32>
    %cst_168 = arith.constant dense<0.000000e+00> : vector<8x256xf32>
    %187 = tpu.matmul %1, %186, %cst_168 {dimension_numbers = #tpu.dot_dimension_numbers<[1], [0], [0], [1], [0, 0, 1, 1], [], []>} : vector<8x72xf32>, vector<72x256xf32>, vector<8x256xf32> -> vector<8x256xf32>
    %188 = vector.broadcast %4 : vector<8x1xf32> to vector<8x256xf32>
    %189 = arith.addf %187, %188 : vector<8x256xf32>
    %cst_169 = arith.constant dense<0.000000e+00> : vector<8xf32>
    %190 = vector.multi_reduction <add>, %189, %cst_169 [1] : vector<8x256xf32> to vector<8xf32>
    %191 = vector.shape_cast %190 : vector<8xf32> to vector<8x1xf32>
    %cst_170 = arith.constant dense<0.000000e+00> : vector<1xf32>
    %192 = vector.multi_reduction <add>, %191, %cst_170 [0] : vector<8x1xf32> to vector<1xf32>
    %193 = vector.shape_cast %192 : vector<1xf32> to vector<1x1xf32>
    %cst_171 = arith.constant 4.8828125E-4 : f32
    %194 = vector.broadcast %cst_171 : f32 to vector<1x1xf32>
    %195 = arith.mulf %193, %194 : vector<1x1xf32>
    %196 = vector.broadcast %195 : vector<1x1xf32> to vector<8x256xf32>
    %197 = arith.subf %189, %196 : vector<8x256xf32>
    %198 = arith.mulf %197, %197 : vector<8x256xf32>
    %cst_172 = arith.constant dense<0.000000e+00> : vector<8xf32>
    %199 = vector.multi_reduction <add>, %198, %cst_172 [1] : vector<8x256xf32> to vector<8xf32>
    %200 = vector.shape_cast %199 : vector<8xf32> to vector<8x1xf32>
    %cst_173 = arith.constant dense<0.000000e+00> : vector<1xf32>
    %201 = vector.multi_reduction <add>, %200, %cst_173 [0] : vector<8x1xf32> to vector<1xf32>
    %202 = vector.shape_cast %201 : vector<1xf32> to vector<1x1xf32>
    %cst_174 = arith.constant 4.8828125E-4 : f32
    %203 = vector.broadcast %cst_174 : f32 to vector<1x1xf32>
    %204 = arith.mulf %202, %203 : vector<1x1xf32>
    %cst_175 = arith.constant 9.99999974E-6 : f32
    %205 = vector.broadcast %cst_175 : f32 to vector<1x1xf32>
    %206 = arith.addf %204, %205 : vector<1x1xf32>
    %207 = math.rsqrt %206 : vector<1x1xf32>
    %208 = vector.broadcast %207 : vector<1x1xf32> to vector<8x1xf32>
    %209 = arith.mulf %5, %208 : vector<8x1xf32>
    %210 = vector.broadcast %209 : vector<8x1xf32> to vector<8x256xf32>
    %211 = arith.mulf %197, %210 : vector<8x256xf32>
    %212 = vector.broadcast %6 : vector<8x1xf32> to vector<8x256xf32>
    %213 = arith.addf %211, %212 : vector<8x256xf32>
    %cst_176 = arith.constant 0.000000e+00 : f32
    %214 = vector.broadcast %cst_176 : f32 to vector<8x256xf32>
    %215 = arith.maximumf %213, %214 : vector<8x256xf32>
    %c0_177 = arith.constant 0 : index
    %c128_178 = arith.constant 128 : index
    %216 = vector.load %arg5[%c0_177, %c128_178] : memref<8x512xf32, #tpu.memory_space<vmem>>, vector<8x256xf32>
    tpu.vector_store %arg5[%c0_177, %c128_178], %215 {strides = array<i32>} : memref<8x512xf32, #tpu.memory_space<vmem>>, vector<8x256xf32>,
    %c0_179 = arith.constant 0 : index
    %c111_180 = arith.constant 111 : index
    %217 = vector.load %arg5[%c0_179, %c111_180] : memref<8x512xf32, #tpu.memory_space<vmem>>, vector<8x256xf32>
    %cst_181 = arith.constant 0.000000e+00 : f32
    %218 = vector.broadcast %cst_181 : f32 to vector<8x256xf32>
    %219 = arith.select %14, %217, %218 : vector<8x256xi1>, vector<8x256xf32>
    %c0_182 = arith.constant 0 : index
    %c0_183 = arith.constant 0 : index
    %220 = vector.load %arg6[%c0_182, %c0_183] : memref<72x256xf32, #tpu.memory_space<vmem>>, vector<8x256xf32>
    tpu.vector_store %arg6[%c0_182, %c0_183], %219 {strides = array<i32>} : memref<72x256xf32, #tpu.memory_space<vmem>>, vector<8x256xf32>,
    %c0_184 = arith.constant 0 : index
    %c112_185 = arith.constant 112 : index
    %221 = vector.load %arg5[%c0_184, %c112_185] : memref<8x512xf32, #tpu.memory_space<vmem>>, vector<8x256xf32>
    %c8_186 = arith.constant 8 : index
    %c0_187 = arith.constant 0 : index
    %222 = vector.load %arg6[%c8_186, %c0_187] : memref<72x256xf32, #tpu.memory_space<vmem>>, vector<8x256xf32>
    tpu.vector_store %arg6[%c8_186, %c0_187], %221 {strides = array<i32>} : memref<72x256xf32, #tpu.memory_space<vmem>>, vector<8x256xf32>,
    %c0_188 = arith.constant 0 : index
    %c113_189 = arith.constant 113 : index
    %223 = vector.load %arg5[%c0_188, %c113_189] : memref<8x512xf32, #tpu.memory_space<vmem>>, vector<8x256xf32>
    %cst_190 = arith.constant 0.000000e+00 : f32
    %224 = vector.broadcast %cst_190 : f32 to vector<8x256xf32>
    %225 = arith.select %16, %223, %224 : vector<8x256xi1>, vector<8x256xf32>
    %c16_191 = arith.constant 16 : index
    %c0_192 = arith.constant 0 : index
    %226 = vector.load %arg6[%c16_191, %c0_192] : memref<72x256xf32, #tpu.memory_space<vmem>>, vector<8x256xf32>
    tpu.vector_store %arg6[%c16_191, %c0_192], %225 {strides = array<i32>} : memref<72x256xf32, #tpu.memory_space<vmem>>, vector<8x256xf32>,
    %c0_193 = arith.constant 0 : index
    %c127_194 = arith.constant 127 : index
    %227 = vector.load %arg5[%c0_193, %c127_194] : memref<8x512xf32, #tpu.memory_space<vmem>>, vector<8x256xf32>
    %cst_195 = arith.constant 0.000000e+00 : f32
    %228 = vector.broadcast %cst_195 : f32 to vector<8x256xf32>
    %229 = arith.select %14, %227, %228 : vector<8x256xi1>, vector<8x256xf32>
    %c24_196 = arith.constant 24 : index
    %c0_197 = arith.constant 0 : index
    %230 = vector.load %arg6[%c24_196, %c0_197] : memref<72x256xf32, #tpu.memory_space<vmem>>, vector<8x256xf32>
    tpu.vector_store %arg6[%c24_196, %c0_197], %229 {strides = array<i32>} : memref<72x256xf32, #tpu.memory_space<vmem>>, vector<8x256xf32>,
    %c0_198 = arith.constant 0 : index
    %c128_199 = arith.constant 128 : index
    %231 = vector.load %arg5[%c0_198, %c128_199] : memref<8x512xf32, #tpu.memory_space<vmem>>, vector<8x256xf32>
    %c32_200 = arith.constant 32 : index
    %c0_201 = arith.constant 0 : index
    %232 = vector.load %arg6[%c32_200, %c0_201] : memref<72x256xf32, #tpu.memory_space<vmem>>, vector<8x256xf32>
    tpu.vector_store %arg6[%c32_200, %c0_201], %231 {strides = array<i32>} : memref<72x256xf32, #tpu.memory_space<vmem>>, vector<8x256xf32>,
    %c0_202 = arith.constant 0 : index
    %c129_203 = arith.constant 129 : index
    %233 = vector.load %arg5[%c0_202, %c129_203] : memref<8x512xf32, #tpu.memory_space<vmem>>, vector<8x256xf32>
    %cst_204 = arith.constant 0.000000e+00 : f32
    %234 = vector.broadcast %cst_204 : f32 to vector<8x256xf32>
    %235 = arith.select %16, %233, %234 : vector<8x256xi1>, vector<8x256xf32>
    %c40_205 = arith.constant 40 : index
    %c0_206 = arith.constant 0 : index
    %236 = vector.load %arg6[%c40_205, %c0_206] : memref<72x256xf32, #tpu.memory_space<vmem>>, vector<8x256xf32>
    tpu.vector_store %arg6[%c40_205, %c0_206], %235 {strides = array<i32>} : memref<72x256xf32, #tpu.memory_space<vmem>>, vector<8x256xf32>,
    %c0_207 = arith.constant 0 : index
    %c143_208 = arith.constant 143 : index
    %237 = vector.load %arg5[%c0_207, %c143_208] : memref<8x512xf32, #tpu.memory_space<vmem>>, vector<8x256xf32>
    %cst_209 = arith.constant 0.000000e+00 : f32
    %238 = vector.broadcast %cst_209 : f32 to vector<8x256xf32>
    %239 = arith.select %14, %237, %238 : vector<8x256xi1>, vector<8x256xf32>
    %c48_210 = arith.constant 48 : index
    %c0_211 = arith.constant 0 : index
    %240 = vector.load %arg6[%c48_210, %c0_211] : memref<72x256xf32, #tpu.memory_space<vmem>>, vector<8x256xf32>
    tpu.vector_store %arg6[%c48_210, %c0_211], %239 {strides = array<i32>} : memref<72x256xf32, #tpu.memory_space<vmem>>, vector<8x256xf32>,
    %c0_212 = arith.constant 0 : index
    %c144_213 = arith.constant 144 : index
    %241 = vector.load %arg5[%c0_212, %c144_213] : memref<8x512xf32, #tpu.memory_space<vmem>>, vector<8x256xf32>
    %c56_214 = arith.constant 56 : index
    %c0_215 = arith.constant 0 : index
    %242 = vector.load %arg6[%c56_214, %c0_215] : memref<72x256xf32, #tpu.memory_space<vmem>>, vector<8x256xf32>
    tpu.vector_store %arg6[%c56_214, %c0_215], %241 {strides = array<i32>} : memref<72x256xf32, #tpu.memory_space<vmem>>, vector<8x256xf32>,
    %c0_216 = arith.constant 0 : index
    %c145_217 = arith.constant 145 : index
    %243 = vector.load %arg5[%c0_216, %c145_217] : memref<8x512xf32, #tpu.memory_space<vmem>>, vector<8x256xf32>
    %cst_218 = arith.constant 0.000000e+00 : f32
    %244 = vector.broadcast %cst_218 : f32 to vector<8x256xf32>
    %245 = arith.select %16, %243, %244 : vector<8x256xi1>, vector<8x256xf32>
    %c64_219 = arith.constant 64 : index
    %c0_220 = arith.constant 0 : index
    %246 = vector.load %arg6[%c64_219, %c0_220] : memref<72x256xf32, #tpu.memory_space<vmem>>, vector<8x256xf32>
    tpu.vector_store %arg6[%c64_219, %c0_220], %245 {strides = array<i32>} : memref<72x256xf32, #tpu.memory_space<vmem>>, vector<8x256xf32>,
    %c0_221 = arith.constant 0 : index
    %c0_222 = arith.constant 0 : index
    %247 = vector.load %arg6[%c0_221, %c0_222] : memref<72x256xf32, #tpu.memory_space<vmem>>, vector<72x256xf32>
    %cst_223 = arith.constant dense<0.000000e+00> : vector<8x256xf32>
    %248 = tpu.matmul %3, %247, %cst_223 {dimension_numbers = #tpu.dot_dimension_numbers<[1], [0], [0], [1], [0, 0, 1, 1], [], []>} : vector<8x72xf32>, vector<72x256xf32>, vector<8x256xf32> -> vector<8x256xf32>
    %249 = vector.broadcast %7 : vector<8x1xf32> to vector<8x256xf32>
    %250 = arith.addf %248, %249 : vector<8x256xf32>
    %cst_224 = arith.constant dense<0.000000e+00> : vector<8xf32>
    %251 = vector.multi_reduction <add>, %250, %cst_224 [1] : vector<8x256xf32> to vector<8xf32>
    %252 = vector.shape_cast %251 : vector<8xf32> to vector<8x1xf32>
    %cst_225 = arith.constant dense<0.000000e+00> : vector<1xf32>
    %253 = vector.multi_reduction <add>, %252, %cst_225 [0] : vector<8x1xf32> to vector<1xf32>
    %254 = vector.shape_cast %253 : vector<1xf32> to vector<1x1xf32>
    %cst_226 = arith.constant 4.8828125E-4 : f32
    %255 = vector.broadcast %cst_226 : f32 to vector<1x1xf32>
    %256 = arith.mulf %254, %255 : vector<1x1xf32>
    %257 = vector.broadcast %256 : vector<1x1xf32> to vector<8x256xf32>
    %258 = arith.subf %250, %257 : vector<8x256xf32>
    %259 = arith.mulf %258, %258 : vector<8x256xf32>
    %cst_227 = arith.constant dense<0.000000e+00> : vector<8xf32>
    %260 = vector.multi_reduction <add>, %259, %cst_227 [1] : vector<8x256xf32> to vector<8xf32>
    %261 = vector.shape_cast %260 : vector<8xf32> to vector<8x1xf32>
    %cst_228 = arith.constant dense<0.000000e+00> : vector<1xf32>
    %262 = vector.multi_reduction <add>, %261, %cst_228 [0] : vector<8x1xf32> to vector<1xf32>
    %263 = vector.shape_cast %262 : vector<1xf32> to vector<1x1xf32>
    %cst_229 = arith.constant 4.8828125E-4 : f32
    %264 = vector.broadcast %cst_229 : f32 to vector<1x1xf32>
    %265 = arith.mulf %263, %264 : vector<1x1xf32>
    %cst_230 = arith.constant 9.99999974E-6 : f32
    %266 = vector.broadcast %cst_230 : f32 to vector<1x1xf32>
    %267 = arith.addf %265, %266 : vector<1x1xf32>
    %268 = math.rsqrt %267 : vector<1x1xf32>
    %269 = vector.broadcast %268 : vector<1x1xf32> to vector<8x1xf32>
    %270 = arith.mulf %8, %269 : vector<8x1xf32>
    %271 = vector.broadcast %270 : vector<8x1xf32> to vector<8x256xf32>
    %272 = arith.mulf %258, %271 : vector<8x256xf32>
    %273 = vector.broadcast %9 : vector<8x1xf32> to vector<8x256xf32>
    %274 = arith.addf %272, %273 : vector<8x256xf32>
    %cst_231 = arith.constant 0.000000e+00 : f32
    %275 = vector.broadcast %cst_231 : f32 to vector<8x256xf32>
    %276 = arith.maximumf %274, %275 : vector<8x256xf32>
    %c1_232 = arith.constant 1 : index
    %c0_233 = arith.constant 0 : index
    %c0_234 = arith.constant 0 : index
    %277 = vector.load %arg1[%c1_232, %c0_233, %c0_234] : memref<2x8x256xf32, #tpu.memory_space<vmem>>, vector<1x8x256xf32>
    %278 = vector.shape_cast %277 : vector<1x8x256xf32> to vector<8x256xf32>
    %279 = arith.addf %278, %276 : vector<8x256xf32>
    %cst_235 = arith.constant 0.000000e+00 : f32
    %280 = vector.broadcast %cst_235 : f32 to vector<8x256xf32>
    %281 = arith.maximumf %279, %280 : vector<8x256xf32>
    %c1_236 = arith.constant 1 : index
    %c0_237 = arith.constant 0 : index
    %c0_238 = arith.constant 0 : index
    %282 = vector.load %arg4[%c1_236, %c0_237, %c0_238] : memref<2x8x256xf32, #tpu.memory_space<vmem>>, vector<1x8x256xf32>
    %283 = vector.shape_cast %282 : vector<1x8x256xf32> to vector<8x256xf32>
    %284 = vector.shape_cast %281 : vector<8x256xf32> to vector<1x8x256xf32>
    tpu.vector_store %arg4[%c1_236, %c0_237, %c0_238], %284 {strides = array<i32>} : memref<2x8x256xf32, #tpu.memory_space<vmem>>, vector<1x8x256xf32>,
    return
  }
  func.func @transform_0(%arg0: i32) -> (i32, i32, i32) {
    %c0_i32 = arith.constant 0 : i32
    %c0_i32_0 = arith.constant 0 : i32
    %c0_i32_1 = arith.constant 0 : i32
    %c0_i32_2 = arith.constant 0 : i32
    return %c0_i32, %c0_i32_0, %c0_i32_1 : i32, i32, i32
  }
  func.func @transform_1(%arg0: i32) -> (i32, i32, i32) {
    %c0_i32 = arith.constant 0 : i32
    %c0_i32_0 = arith.constant 0 : i32
    %c0_i32_1 = arith.constant 0 : i32
    %c0_i32_2 = arith.constant 0 : i32
    return %c0_i32, %c0_i32_0, %c0_i32_1 : i32, i32, i32
  }
  func.func @transform_2(%arg0: i32) -> (i32, i32) {
    %c0_i32 = arith.constant 0 : i32
    %c0_i32_0 = arith.constant 0 : i32
    %c0_i32_1 = arith.constant 0 : i32
    return %c0_i32, %c0_i32_0 : i32, i32
  }
  func.func @transform_3(%arg0: i32) -> (i32, i32, i32) {
    %c0_i32 = arith.constant 0 : i32
    %c0_i32_0 = arith.constant 0 : i32
    %c0_i32_1 = arith.constant 0 : i32
    %c0_i32_2 = arith.constant 0 : i32
    return %c0_i32, %c0_i32_0, %c0_i32_1 : i32, i32, i32
  }
}

</mosaic_0001>

<llo_original>
// kernel: tpu_custom_call.1
$region0: #{tpu_custom_call.1}
  #allocation0 [shape = 'u32[]', space=smem, size = 0x4, offset = 0x4, fixed_abs, tag = 'smem constant byte address 0x4 - core index']
  #allocation1 [shape = 'u32[144,128]{1,0:T(1,128)}', space=vmem, size = 0x12000, scoped, tag = 'internal scratch']
  #allocation2 [shape = 'f32[8,512]{1,0:T(8,128)}', space=vmem, size = 0x4000, scoped, tag = 'scratch operand']
  #allocation3 [shape = 'f32[72,256]{1,0:T(8,128)}', space=vmem, size = 0x12000, scoped, tag = 'scratch operand']
  %s0 = inlined_call_operand.hbm [shape: f32[2,8,256], index: 0, kind: input, shape index: {}]
  %s1 = inlined_call_operand.hbm [shape: f32[2,8,72], index: 1, kind: input, shape index: {}]
  %s2 = inlined_call_operand.hbm [shape: f32[8,6], index: 2, kind: input, shape index: {}]
  %s3 = inlined_call_operand.hbm [shape: f32[2,8,256], index: 3, kind: output, shape index: {}]
  %s4 = sld [smem:[#allocation0]]
  $region34: #{tpu_custom_call.1} parent=0
    _
  %s6 = ssub.s32 1, %s4
  %s7 = scalar_select 0, %s6, %s4
  $region1: #{tpu_custom_call.1} parent=0
    #allocation4 [shape = 'u8[16384]{0}', space=vmem, size = 0x4000, scoped, tag = 'input window, operand 0, single buffered']
    #allocation5 [shape = 's32[1]{0}', space=sflag, size = 0x4, scoped, tag = 'scoped memory for tpu_custom_call.1']
    #allocation6 [shape = 's32[1]{0}', space=sflag, size = 0x4, scoped, tag = 'scoped memory for tpu_custom_call.1']
    #allocation7 [shape = 'u8[8192]{0}', space=vmem, size = 0x2000, scoped, tag = 'input window, operand 1, single buffered']
    #allocation8 [shape = 's32[1]{0}', space=sflag, size = 0x4, scoped, tag = 'scoped memory for tpu_custom_call.1']
    #allocation9 [shape = 'u8[4096]{0}', space=vmem, size = 0x1000, scoped, tag = 'input window, operand 2, single buffered']
    #allocation10 [shape = 'u8[16384]{0}', space=vmem, size = 0x4000, scoped, tag = 'output window, operand 0, single buffered']
    %8 = vsyncpa [#allocation5], 0
    %9 = vsyncpa [#allocation8], 0
    %10 = vsyncpa [#allocation6], 0
    // Predicated region
    $region2: #{tpu_custom_call.1} parent=1 // pred_check
      _
    $region3: #{tpu_custom_call.1} parent=1 // pred_check_branch
      %12 = sbr.rel (0) target = $region5
    $region4: #{tpu_custom_call.1} parent=1 // pred_region
      %s14 = ssub.s32 512, 512
      %15 = vsyncadd [#allocation5], %s14
      %s16 = sshll.u32 [#allocation4], 4
      %s17 = int_to_ptr.vmem [resolvable:$true] %s16
      %22 = dma.hbm_to_vmem [thread:$0]  %s0, 512, %s17, [#allocation5], 256, 256, 16
    $region5: #{tpu_custom_call.1} parent=1 // pred_fallthru
      _
    // Predicated region
    $region6: #{tpu_custom_call.1} parent=1 // pred_check
      _
    $region7: #{tpu_custom_call.1} parent=1 // pred_check_branch
      %24 = sbr.rel (0) target = $region9
    $region8: #{tpu_custom_call.1} parent=1 // pred_region
      %s26 = ssub.s32 256, 256
      %27 = vsyncadd [#allocation8], %s26
      %s28 = sshll.u32 [#allocation7], 4
      %s29 = int_to_ptr.vmem [resolvable:$true] %s28
      %34 = dma.hbm_to_vmem [thread:$0]  %s1, 256, %s29, [#allocation8], 128, 128, 8
    $region9: #{tpu_custom_call.1} parent=1 // pred_fallthru
      _
    // Predicated region
    $region10: #{tpu_custom_call.1} parent=1 // pred_check
      _
    $region11: #{tpu_custom_call.1} parent=1 // pred_check_branch
      %36 = sbr.rel (0) target = $region13
    $region12: #{tpu_custom_call.1} parent=1 // pred_region
      %s38 = ssub.s32 128, 128
      %39 = vsyncadd [#allocation8], %s38
      %s41 = sshll.u32 [#allocation9], 4
      %s42 = int_to_ptr.vmem [resolvable:$true] %s41
      %44 = dma.hbm_to_vmem [thread:$0]  %s2, 128, %s42, [#allocation8]
    $region13: #{tpu_custom_call.1} parent=1 // pred_fallthru
      _
    // Predicated region
    $region14: #{tpu_custom_call.1} parent=1 // pred_check
      _
    $region15: #{tpu_custom_call.1} parent=1 // pred_check_branch
      %46 = sbr.rel (0) target = $region17
    $region16: #{tpu_custom_call.1} parent=1 // pred_region
      %47 = dma.done [#allocation5], 512
    $region17: #{tpu_custom_call.1} parent=1 // pred_fallthru
      _
    // Predicated region
    $region18: #{tpu_custom_call.1} parent=1 // pred_check
      _
    $region19: #{tpu_custom_call.1} parent=1 // pred_check_branch
      %49 = sbr.rel (0) target = $region21
    $region20: #{tpu_custom_call.1} parent=1 // pred_region
      %50 = dma.done [#allocation8], 256
    $region21: #{tpu_custom_call.1} parent=1 // pred_fallthru
      _
    // Predicated region
    $region22: #{tpu_custom_call.1} parent=1 // pred_check
      _
    $region23: #{tpu_custom_call.1} parent=1 // pred_check_branch
      %52 = sbr.rel (0) target = $region25
    $region24: #{tpu_custom_call.1} parent=1 // pred_region
      %53 = dma.done [#allocation8], 128
    $region25: #{tpu_custom_call.1} parent=1 // pred_fallthru
      _
    %v54 = vld [vmem:[#allocation7] sm:$0xff]
    %s55 = scalar_lea.vmem [#allocation7], 8
    %v56 = vld [vmem:[%s55] sm:$0xff]
    %v57 = vld [vmem:[#allocation9] sm:$0xff]
    %v58 = vlaneseq
    %v59 = vand.u32 %v58, 127
    %v60 = vadd.s32 %v59, 128
    %vm61 = vcmp.lt.s32.totalorder %v59, 0
    %v62 = vsub.s32 0, %v59
    %v63 = vsel %vm61, %v62, %v59
    %v64 = vshrl.u32 %v63, 4
    %v65 = vand.u32 %v63, 15
    %v66 = vsub.s32 0, %v65
    %v67 = vsel %vm61, %v66, %v65
    %vm68 = vcmp.lt.s32.totalorder %v60, 0
    %v69 = vsub.s32 0, %v60
    %v70 = vsel %vm68, %v69, %v60
    %v71 = vshrl.u32 %v70, 4
    %v72 = vand.u32 %v70, 15
    %v73 = vsub.s32 0, %v72
    %v74 = vsel %vm68, %v73, %v72
    %vm75 = vcmp.ge.s32.totalorder %v67, 1
    %vm76 = vcmp.ge.s32.totalorder %v74, 1
    %vm77 = vcmp.le.s32.totalorder %v67, 14
    %vm78 = vcmp.le.s32.totalorder %v74, 14
    %79 = vst [vmem:[#allocation2] sm:$0xff] 0.0
    %80 = vst [vmem:[#allocation2 + $0x18] sm:$0xff] 0.0
    %v81 = vld [vmem:[#allocation4] sm:$0xff]
    %v82 = vld [vmem:[#allocation4 + $0x8] sm:$0xff]
    %83 = vst [vmem:[#allocation2 + $0x8] sm:$0xff] %v81
    %84 = vst [vmem:[#allocation2 + $0x10] sm:$0xff] %v82
    %v85 = vld [vmem:[#allocation2] sm:$0xff]
    %v86 = vld [vmem:[#allocation2 + $0x8] sm:$0xff]
    %v87 = vld [vmem:[#allocation2 + $0x10] sm:$0xff]
    %91 = vrot.lane.b32.xlu0 %v85, 17
    %v92 = vpop.permute.xlu0 %91
    %93 = vrot.lane.b32.xlu0 %v86, 17
    %v94 = vpop.permute.xlu0 %93
    %95 = vrot.lane.b32.xlu0 %v87, 17
    %v96 = vpop.permute.xlu0 %95
    %vm97 = vcmask 138240
    %v98 = vsel %vm97, %v92, %v94
    %v99 = vsel %vm97, %v94, %v96
    %v102 = vsel %vm75, %v98, 0.0
    %v103 = vsel %vm76, %v99, 0.0
    %104 = vst [vmem:[#allocation3] sm:$0xff] %v102
    %105 = vst [vmem:[#allocation3 + $0x8] sm:$0xff] %v103
    %v106 = vld [vmem:[#allocation2] sm:$0xff]
    %v107 = vld [vmem:[#allocation2 + $0x8] sm:$0xff]
    %v108 = vld [vmem:[#allocation2 + $0x10] sm:$0xff]
    %112 = vrot.lane.b32.xlu0 %v106, 16
    %v113 = vpop.permute.xlu0 %112
    %114 = vrot.lane.b32.xlu0 %v107, 16
    %v115 = vpop.permute.xlu0 %114
    %116 = vrot.lane.b32.xlu0 %v108, 16
    %v117 = vpop.permute.xlu0 %116
    %vm118 = vcmask 130048
    %v119 = vsel %vm118, %v113, %v115
    %v120 = vsel %vm118, %v115, %v117
    %123 = vst [vmem:[#allocation3 + $0x10] sm:$0xff] %v119
    %124 = vst [vmem:[#allocation3 + $0x18] sm:$0xff] %v120
    %v125 = vld [vmem:[#allocation2] sm:$0xff]
    %v126 = vld [vmem:[#allocation2 + $0x8] sm:$0xff]
    %v127 = vld [vmem:[#allocation2 + $0x10] sm:$0xff]
    %131 = vrot.lane.b32.xlu0 %v125, 15
    %v132 = vpop.permute.xlu0 %131
    %133 = vrot.lane.b32.xlu0 %v126, 15
    %v134 = vpop.permute.xlu0 %133
    %135 = vrot.lane.b32.xlu0 %v127, 15
    %v136 = vpop.permute.xlu0 %135
    %vm137 = vcmask 121856
    %v138 = vsel %vm137, %v132, %v134
    %v139 = vsel %vm137, %v134, %v136
    %v142 = vsel %vm77, %v138, 0.0
    %v143 = vsel %vm78, %v139, 0.0
    %144 = vst [vmem:[#allocation3 + $0x20] sm:$0xff] %v142
    %145 = vst [vmem:[#allocation3 + $0x28] sm:$0xff] %v143
    %v146 = vld [vmem:[#allocation2] sm:$0xff]
    %v147 = vld [vmem:[#allocation2 + $0x8] sm:$0xff]
    %v148 = vld [vmem:[#allocation2 + $0x10] sm:$0xff]
    %152 = vrot.lane.b32.xlu0 %v146, 1
    %v153 = vpop.permute.xlu0 %152
    %154 = vrot.lane.b32.xlu0 %v147, 1
    %v155 = vpop.permute.xlu0 %154
    %156 = vrot.lane.b32.xlu0 %v148, 1
    %v157 = vpop.permute.xlu0 %156
    %vm158 = vcmask 7168
    %v159 = vsel %vm158, %v153, %v155
    %v160 = vsel %vm158, %v155, %v157
    %v163 = vsel %vm75, %v159, 0.0
    %v164 = vsel %vm76, %v160, 0.0
    %165 = vst [vmem:[#allocation3 + $0x30] sm:$0xff] %v163
    %166 = vst [vmem:[#allocation3 + $0x38] sm:$0xff] %v164
    %v167 = vld [vmem:[#allocation2 + $0x8] sm:$0xff]
    %v168 = vld [vmem:[#allocation2 + $0x10] sm:$0xff]
    %169 = vst [vmem:[#allocation3 + $0x40] sm:$0xff] %v167
    %170 = vst [vmem:[#allocation3 + $0x48] sm:$0xff] %v168
    %v171 = vld [vmem:[#allocation2 + $0x8] sm:$0xff]
    %v172 = vld [vmem:[#allocation2 + $0x10] sm:$0xff]
    %v173 = vld [vmem:[#allocation2 + $0x18] sm:$0xff]
    %177 = vrot.lane.b32.xlu0 %v171, 127
    %v178 = vpop.permute.xlu0 %177
    %179 = vrot.lane.b32.xlu0 %v172, 127
    %v180 = vpop.permute.xlu0 %179
    %181 = vrot.lane.b32.xlu0 %v173, 127
    %v182 = vpop.permute.xlu0 %181
    %vm183 = vcmask 1039360
    %v184 = vsel %vm183, %v178, %v180
    %v185 = vsel %vm183, %v180, %v182
    %v188 = vsel %vm77, %v184, 0.0
    %v189 = vsel %vm78, %v185, 0.0
    %190 = vst [vmem:[#allocation3 + $0x50] sm:$0xff] %v188
    %191 = vst [vmem:[#allocation3 + $0x58] sm:$0xff] %v189
    %v192 = vld [vmem:[#allocation2 + $0x8] sm:$0xff]
    %v193 = vld [vmem:[#allocation2 + $0x10] sm:$0xff]
    %v194 = vld [vmem:[#allocation2 + $0x18] sm:$0xff]
    %198 = vrot.lane.b32.xlu0 %v192, 113
    %v199 = vpop.permute.xlu0 %198
    %200 = vrot.lane.b32.xlu0 %v193, 113
    %v201 = vpop.permute.xlu0 %200
    %202 = vrot.lane.b32.xlu0 %v194, 113
    %v203 = vpop.permute.xlu0 %202
    %vm204 = vcmask 924672
    %v205 = vsel %vm204, %v199, %v201
    %v206 = vsel %vm204, %v201, %v203
    %v209 = vsel %vm75, %v205, 0.0
    %v210 = vsel %vm76, %v206, 0.0
    %211 = vst [vmem:[#allocation3 + $0x60] sm:$0xff] %v209
    %212 = vst [vmem:[#allocation3 + $0x68] sm:$0xff] %v210
    %v213 = vld [vmem:[#allocation2 + $0x8] sm:$0xff]
    %v214 = vld [vmem:[#allocation2 + $0x10] sm:$0xff]
    %v215 = vld [vmem:[#allocation2 + $0x18] sm:$0xff]
    %219 = vrot.lane.b32.xlu0 %v213, 112
    %v220 = vpop.permute.xlu0 %219
    %221 = vrot.lane.b32.xlu0 %v214, 112
    %v222 = vpop.permute.xlu0 %221
    %223 = vrot.lane.b32.xlu0 %v215, 112
    %v224 = vpop.permute.xlu0 %223
    %vm225 = vcmask 916480
    %v226 = vsel %vm225, %v220, %v222
    %v227 = vsel %vm225, %v222, %v224
    %230 = vst [vmem:[#allocation3 + $0x70] sm:$0xff] %v226
    %231 = vst [vmem:[#allocation3 + $0x78] sm:$0xff] %v227
    %v232 = vld [vmem:[#allocation2 + $0x8] sm:$0xff]
    %v233 = vld [vmem:[#allocation2 + $0x10] sm:$0xff]
    %v234 = vld [vmem:[#allocation2 + $0x18] sm:$0xff]
    %238 = vrot.lane.b32.xlu0 %v232, 111
    %v239 = vpop.permute.xlu0 %238
    %240 = vrot.lane.b32.xlu0 %v233, 111
    %v241 = vpop.permute.xlu0 %240
    %242 = vrot.lane.b32.xlu0 %v234, 111
    %v243 = vpop.permute.xlu0 %242
    %vm244 = vcmask 908288
    %v245 = vsel %vm244, %v239, %v241
    %v246 = vsel %vm244, %v241, %v243
    %v249 = vsel %vm77, %v245, 0.0
    %v250 = vsel %vm78, %v246, 0.0
    %251 = vst [vmem:[#allocation3 + $0x80] sm:$0xff] %v249
    %252 = vst [vmem:[#allocation3 + $0x88] sm:$0xff] %v250
    %v253 = vld [vmem:[#allocation3] sm:$0xff]
    %v254 = vld [vmem:[#allocation3 + $0x8] sm:$0xff]
    %v255 = vld [vmem:[#allocation3 + $0x10] sm:$0xff]
    %v256 = vld [vmem:[#allocation3 + $0x18] sm:$0xff]
    %v257 = vld [vmem:[#allocation3 + $0x20] sm:$0xff]
    %v258 = vld [vmem:[#allocation3 + $0x28] sm:$0xff]
    %v259 = vld [vmem:[#allocation3 + $0x30] sm:$0xff]
    %v260 = vld [vmem:[#allocation3 + $0x38] sm:$0xff]
    %v261 = vld [vmem:[#allocation3 + $0x40] sm:$0xff]
    %v262 = vld [vmem:[#allocation3 + $0x48] sm:$0xff]
    %v263 = vld [vmem:[#allocation3 + $0x50] sm:$0xff]
    %v264 = vld [vmem:[#allocation3 + $0x58] sm:$0xff]
    %v265 = vld [vmem:[#allocation3 + $0x60] sm:$0xff]
    %v266 = vld [vmem:[#allocation3 + $0x68] sm:$0xff]
    %v267 = vld [vmem:[#allocation3 + $0x70] sm:$0xff]
    %v268 = vld [vmem:[#allocation3 + $0x78] sm:$0xff]
    %v269 = vld [vmem:[#allocation3 + $0x80] sm:$0xff]
    %v270 = vld [vmem:[#allocation3 + $0x88] sm:$0xff]
    %272 = vset.pattern.permute.xlu0 0
    %273 = vperm.xlu0 %272, %v57
    %v274 = vpop.permute.xlu0 %273
    %vm276 = vcmask 588800
    %v278 = vsel %vm276, %v54, 0
    %280 = vmatprep.subr.mxu0 %v254
    %281 = vmatpush1.msra.mxu0 %v253
    %282 = vmatprep.subr.mxu0 %v256
    %283 = vmatpush1.msra.mxu0 %v255
    %284 = vmatprep.subr.mxu0 %v258
    %285 = vmatpush1.msra.mxu0 %v257
    %286 = vmatprep.subr.mxu0 %v260
    %287 = vmatpush1.msra.mxu0 %v259
    %288 = vmatprep.subr.mxu0 %v262
    %289 = vmatpush1.msra.mxu0 %v261
    %290 = vmatprep.subr.mxu0 %v264
    %291 = vmatpush1.msra.mxu0 %v263
    %292 = vmatprep.subr.mxu0 %v266
    %293 = vmatpush1.msra.mxu0 %v265
    %294 = vmatprep.subr.mxu0 %v268
    %295 = vmatpush1.msra.mxu0 %v267
    %296 = vmatprep.subr.mxu0 %v270
    %297 = vmatpush1.msra.mxu0 %v269
    %298 = vmatprep.subr.mxu0 0.0
    %299 = vmatpush1.msra.mxu0 0.0
    %300 = vmatprep.subr.mxu0 0.0
    %301 = vmatpush1.msra.mxu0 0.0
    %302 = vmatprep.subr.mxu0 0.0
    %303 = vmatpush1.msra.mxu0 0.0
    %304 = vmatprep.subr.mxu0 0.0
    %305 = vmatpush1.msra.mxu0 0.0
    %306 = vmatprep.subr.mxu0 0.0
    %307 = vmatpush1.msra.mxu0 0.0
    %308 = vmatprep.subr.mxu0 0.0
    %309 = vmatpush1.msra.mxu0 0.0
    %310 = vmatprep.subr.mxu0 0.0
    %311 = vmatpush1.msra.mxu0 0.0
    %312 = vmatprep.subr.mxu0 0.0
    %313 = vmatpush1.msra.mxu0 0.0
    %314 = vmatprep.subr.mxu0 0.0
    %315 = vmatpush1.msra.mxu0 0.0
    %316 = vmatprep.subr.mxu0 0.0
    %317 = vmatpush1.msra.mxu0 0.0
    %318 = vmatprep.subr.mxu0 0.0
    %319 = vmatpush1.msra.mxu0 0.0
    %320 = vmatprep.subr.mxu0 0.0
    %321 = vmatpush1.msra.mxu0 0.0
    %322 = vmatprep.subr.mxu0 0.0
    %323 = vmatpush1.msra.mxu0 0.0
    %324 = vmatprep.subr.mxu0 0.0
    %325 = vmatpush1.msra.mxu0 0.0
    %326 = vmatprep.subr.mxu0 0.0
    %327 = vmatpush1.msra.mxu0 0.0
    %328 = vmatprep.subr.mxu0 0.0
    %329 = vmatpush1.msra.mxu0 0.0
    %330 = vmatprep.subr.mxu0 0.0
    %331 = vmatpush1.msra.mxu0 0.0
    %332 = vmatprep.subr.mxu0 0.0
    %333 = vmatpush1.msra.mxu0 0.0
    %334 = vmatprep.subr.mxu0 0.0
    %335 = vmatpush1.msra.mxu0 0.0
    %336 = vmatprep.subr.mxu0 0.0
    %337 = vmatpush1.msra.mxu0 0.0
    %338 = vmatprep.subr.mxu0 0.0
    %339 = vmatpush1.msra.mxu0 0.0
    %340 = vmatprep.subr.mxu0 0.0
    %341 = vmatpush1.msra.mxu0 0.0
    %342 = vmatprep.subr.mxu0 0.0
    %343 = vmatpush1.msra.mxu0 0.0
    %344 = vmatprep.mubr.f32.mxu0 0.0
    %345 = vmatmul.mubr.f32.gmra.mrb[0].mxu0 %v278
    %v346 = vpop.f32.mrb[0].mxu0
    %v347 = vadd.f32 %v274, %v346
    %v348 = vpop.f32.mrb[0].mxu0
    %v349 = vadd.f32 %v274, %v348
    %350 = vdwg.mxu0
    %v351 = vadd.f32 %v347, %v349
    %352 = vadd.xlane.f32.xlu0 %v351
    %v353 = vpop.xlane.xlu0 %352
    %v354 = vrot.slane %v353, 4
    %v355 = vadd.f32 %v353, %v354
    %v356 = vrot.slane %v355, 2
    %v357 = vadd.f32 %v355, %v356
    %v358 = vrot.slane %v357, 1
    %v359 = vadd.f32 %v357, %v358
    %v360 = vmul.f32 %v359, 0.00048828125
    %v361 = vsub.f32 %v347, %v360
    %v362 = vsub.f32 %v349, %v360
    %v363 = vmul.f32 %v361, %v361
    %v364 = vmul.f32 %v362, %v362
    %v365 = vadd.f32 %v363, %v364
    %366 = vadd.xlane.f32.xlu0 %v365
    %v367 = vpop.xlane.xlu0 %366
    %v368 = vrot.slane %v367, 4
    %v369 = vadd.f32 %v367, %v368
    %v370 = vrot.slane %v369, 2
    %v371 = vadd.f32 %v369, %v370
    %v372 = vrot.slane %v371, 1
    %v373 = vadd.f32 %v371, %v372
    %v374 = vmul.f32 %v373, 0.00048828125
    %v375 = vadd.f32 %v374, 1e-05
    %v376 = vrsqrt.pop %v375
    %v377 = vmul.f32 %v57, %v376
    %379 = vset.pattern.permute.xlu0 1
    %380 = vperm.xlu0 %379, %v377
    %v381 = vpop.permute.xlu0 %380
    %v383 = vmul.f32 %v361, %v381
    %v384 = vmul.f32 %v362, %v381
    %385 = vset.pattern.permute.xlu0 2
    %386 = vperm.xlu0 %385, %v57
    %v387 = vpop.permute.xlu0 %386
    %v389 = vadd.f32 %v383, %v387
    %v390 = vadd.f32 %v384, %v387
    %v391 = vmax.f32 %v389, 0.0
    %v392 = vmax.f32 %v390, 0.0
    %393 = vst [vmem:[#allocation2 + $0x8] sm:$0xff] %v391
    %394 = vst [vmem:[#allocation2 + $0x10] sm:$0xff] %v392
    %v395 = vld [vmem:[#allocation2] sm:$0xff]
    %v396 = vld [vmem:[#allocation2 + $0x8] sm:$0xff]
    %v397 = vld [vmem:[#allocation2 + $0x10] sm:$0xff]
    %401 = vrot.lane.b32.xlu0 %v395, 17
    %v402 = vpop.permute.xlu0 %401
    %403 = vrot.lane.b32.xlu0 %v396, 17
    %v404 = vpop.permute.xlu0 %403
    %405 = vrot.lane.b32.xlu0 %v397, 17
    %v406 = vpop.permute.xlu0 %405
    %v407 = vsel %vm97, %v402, %v404
    %v408 = vsel %vm97, %v404, %v406
    %v411 = vsel %vm75, %v407, 0.0
    %v412 = vsel %vm76, %v408, 0.0
    %413 = vst [vmem:[#allocation3] sm:$0xff] %v411
    %414 = vst [vmem:[#allocation3 + $0x8] sm:$0xff] %v412
    %v415 = vld [vmem:[#allocation2] sm:$0xff]
    %v416 = vld [vmem:[#allocation2 + $0x8] sm:$0xff]
    %v417 = vld [vmem:[#allocation2 + $0x10] sm:$0xff]
    %421 = vrot.lane.b32.xlu0 %v415, 16
    %v422 = vpop.permute.xlu0 %421
    %423 = vrot.lane.b32.xlu0 %v416, 16
    %v424 = vpop.permute.xlu0 %423
    %425 = vrot.lane.b32.xlu0 %v417, 16
    %v426 = vpop.permute.xlu0 %425
    %v427 = vsel %vm118, %v422, %v424
    %v428 = vsel %vm118, %v424, %v426
    %431 = vst [vmem:[#allocation3 + $0x10] sm:$0xff] %v427
    %432 = vst [vmem:[#allocation3 + $0x18] sm:$0xff] %v428
    %v433 = vld [vmem:[#allocation2] sm:$0xff]
    %v434 = vld [vmem:[#allocation2 + $0x8] sm:$0xff]
    %v435 = vld [vmem:[#allocation2 + $0x10] sm:$0xff]
    %439 = vrot.lane.b32.xlu0 %v433, 15
    %v440 = vpop.permute.xlu0 %439
    %441 = vrot.lane.b32.xlu0 %v434, 15
    %v442 = vpop.permute.xlu0 %441
    %443 = vrot.lane.b32.xlu0 %v435, 15
    %v444 = vpop.permute.xlu0 %443
    %v445 = vsel %vm137, %v440, %v442
    %v446 = vsel %vm137, %v442, %v444
    %v449 = vsel %vm77, %v445, 0.0
    %v450 = vsel %vm78, %v446, 0.0
    %451 = vst [vmem:[#allocation3 + $0x20] sm:$0xff] %v449
    %452 = vst [vmem:[#allocation3 + $0x28] sm:$0xff] %v450
    %v453 = vld [vmem:[#allocation2] sm:$0xff]
    %v454 = vld [vmem:[#allocation2 + $0x8] sm:$0xff]
    %v455 = vld [vmem:[#allocation2 + $0x10] sm:$0xff]
    %459 = vrot.lane.b32.xlu0 %v453, 1
    %v460 = vpop.permute.xlu0 %459
    %461 = vrot.lane.b32.xlu0 %v454, 1
    %v462 = vpop.permute.xlu0 %461
    %463 = vrot.lane.b32.xlu0 %v455, 1
    %v464 = vpop.permute.xlu0 %463
    %v465 = vsel %vm158, %v460, %v462
    %v466 = vsel %vm158, %v462, %v464
    %v469 = vsel %vm75, %v465, 0.0
    %v470 = vsel %vm76, %v466, 0.0
    %471 = vst [vmem:[#allocation3 + $0x30] sm:$0xff] %v469
    %472 = vst [vmem:[#allocation3 + $0x38] sm:$0xff] %v470
    %v473 = vld [vmem:[#allocation2 + $0x8] sm:$0xff]
    %v474 = vld [vmem:[#allocation2 + $0x10] sm:$0xff]
    %475 = vst [vmem:[#allocation3 + $0x40] sm:$0xff] %v473
    %476 = vst [vmem:[#allocation3 + $0x48] sm:$0xff] %v474
    %v477 = vld [vmem:[#allocation2 + $0x8] sm:$0xff]
    %v478 = vld [vmem:[#allocation2 + $0x10] sm:$0xff]
    %v479 = vld [vmem:[#allocation2 + $0x18] sm:$0xff]
    %483 = vrot.lane.b32.xlu0 %v477, 127
    %v484 = vpop.permute.xlu0 %483
    %485 = vrot.lane.b32.xlu0 %v478, 127
    %v486 = vpop.permute.xlu0 %485
    %487 = vrot.lane.b32.xlu0 %v479, 127
    %v488 = vpop.permute.xlu0 %487
    %v489 = vsel %vm183, %v484, %v486
    %v490 = vsel %vm183, %v486, %v488
    %v493 = vsel %vm77, %v489, 0.0
    %v494 = vsel %vm78, %v490, 0.0
    %495 = vst [vmem:[#allocation3 + $0x50] sm:$0xff] %v493
    %496 = vst [vmem:[#allocation3 + $0x58] sm:$0xff] %v494
    %v497 = vld [vmem:[#allocation2 + $0x8] sm:$0xff]
    %v498 = vld [vmem:[#allocation2 + $0x10] sm:$0xff]
    %v499 = vld [vmem:[#allocation2 + $0x18] sm:$0xff]
    %503 = vrot.lane.b32.xlu0 %v497, 113
    %v504 = vpop.permute.xlu0 %503
    %505 = vrot.lane.b32.xlu0 %v498, 113
    %v506 = vpop.permute.xlu0 %505
    %507 = vrot.lane.b32.xlu0 %v499, 113
    %v508 = vpop.permute.xlu0 %507
    %v509 = vsel %vm204, %v504, %v506
    %v510 = vsel %vm204, %v506, %v508
    %v513 = vsel %vm75, %v509, 0.0
    %v514 = vsel %vm76, %v510, 0.0
    %515 = vst [vmem:[#allocation3 + $0x60] sm:$0xff] %v513
    %516 = vst [vmem:[#allocation3 + $0x68] sm:$0xff] %v514
    %v517 = vld [vmem:[#allocation2 + $0x8] sm:$0xff]
    %v518 = vld [vmem:[#allocation2 + $0x10] sm:$0xff]
    %v519 = vld [vmem:[#allocation2 + $0x18] sm:$0xff]
    %523 = vrot.lane.b32.xlu0 %v517, 112
    %v524 = vpop.permute.xlu0 %523
    %525 = vrot.lane.b32.xlu0 %v518, 112
    %v526 = vpop.permute.xlu0 %525
    %527 = vrot.lane.b32.xlu0 %v519, 112
    %v528 = vpop.permute.xlu0 %527
    %v529 = vsel %vm225, %v524, %v526
    %v530 = vsel %vm225, %v526, %v528
    %533 = vst [vmem:[#allocation3 + $0x70] sm:$0xff] %v529
    %534 = vst [vmem:[#allocation3 + $0x78] sm:$0xff] %v530
    %v535 = vld [vmem:[#allocation2 + $0x8] sm:$0xff]
    %v536 = vld [vmem:[#allocation2 + $0x10] sm:$0xff]
    %v537 = vld [vmem:[#allocation2 + $0x18] sm:$0xff]
    %541 = vrot.lane.b32.xlu0 %v535, 111
    %v542 = vpop.permute.xlu0 %541
    %543 = vrot.lane.b32.xlu0 %v536, 111
    %v544 = vpop.permute.xlu0 %543
    %545 = vrot.lane.b32.xlu0 %v537, 111
    %v546 = vpop.permute.xlu0 %545
    %v547 = vsel %vm244, %v542, %v544
    %v548 = vsel %vm244, %v544, %v546
    %v551 = vsel %vm77, %v547, 0.0
    %v552 = vsel %vm78, %v548, 0.0
    %553 = vst [vmem:[#allocation3 + $0x80] sm:$0xff] %v551
    %554 = vst [vmem:[#allocation3 + $0x88] sm:$0xff] %v552
    %v555 = vld [vmem:[#allocation3] sm:$0xff]
    %v556 = vld [vmem:[#allocation3 + $0x8] sm:$0xff]
    %v557 = vld [vmem:[#allocation3 + $0x10] sm:$0xff]
    %v558 = vld [vmem:[#allocation3 + $0x18] sm:$0xff]
    %v559 = vld [vmem:[#allocation3 + $0x20] sm:$0xff]
    %v560 = vld [vmem:[#allocation3 + $0x28] sm:$0xff]
    %v561 = vld [vmem:[#allocation3 + $0x30] sm:$0xff]
    %v562 = vld [vmem:[#allocation3 + $0x38] sm:$0xff]
    %v563 = vld [vmem:[#allocation3 + $0x40] sm:$0xff]
    %v564 = vld [vmem:[#allocation3 + $0x48] sm:$0xff]
    %v565 = vld [vmem:[#allocation3 + $0x50] sm:$0xff]
    %v566 = vld [vmem:[#allocation3 + $0x58] sm:$0xff]
    %v567 = vld [vmem:[#allocation3 + $0x60] sm:$0xff]
    %v568 = vld [vmem:[#allocation3 + $0x68] sm:$0xff]
    %v569 = vld [vmem:[#allocation3 + $0x70] sm:$0xff]
    %v570 = vld [vmem:[#allocation3 + $0x78] sm:$0xff]
    %v571 = vld [vmem:[#allocation3 + $0x80] sm:$0xff]
    %v572 = vld [vmem:[#allocation3 + $0x88] sm:$0xff]
    %573 = vset.pattern.permute.xlu0 3
    %574 = vperm.xlu0 %573, %v57
    %v575 = vpop.permute.xlu0 %574
    %v578 = vsel %vm276, %v56, 0
    %580 = vmatprep.subr.mxu0 %v556
    %581 = vmatpush1.msra.mxu0 %v555
    %582 = vmatprep.subr.mxu0 %v558
    %583 = vmatpush1.msra.mxu0 %v557
    %584 = vmatprep.subr.mxu0 %v560
    %585 = vmatpush1.msra.mxu0 %v559
    %586 = vmatprep.subr.mxu0 %v562
    %587 = vmatpush1.msra.mxu0 %v561
    %588 = vmatprep.subr.mxu0 %v564
    %589 = vmatpush1.msra.mxu0 %v563
    %590 = vmatprep.subr.mxu0 %v566
    %591 = vmatpush1.msra.mxu0 %v565
    %592 = vmatprep.subr.mxu0 %v568
    %593 = vmatpush1.msra.mxu0 %v567
    %594 = vmatprep.subr.mxu0 %v570
    %595 = vmatpush1.msra.mxu0 %v569
    %596 = vmatprep.subr.mxu0 %v572
    %597 = vmatpush1.msra.mxu0 %v571
    %598 = vmatprep.subr.mxu0 0.0
    %599 = vmatpush1.msra.mxu0 0.0
    %600 = vmatprep.subr.mxu0 0.0
    %601 = vmatpush1.msra.mxu0 0.0
    %602 = vmatprep.subr.mxu0 0.0
    %603 = vmatpush1.msra.mxu0 0.0
    %604 = vmatprep.subr.mxu0 0.0
    %605 = vmatpush1.msra.mxu0 0.0
    %606 = vmatprep.subr.mxu0 0.0
    %607 = vmatpush1.msra.mxu0 0.0
    %608 = vmatprep.subr.mxu0 0.0
    %609 = vmatpush1.msra.mxu0 0.0
    %610 = vmatprep.subr.mxu0 0.0
    %611 = vmatpush1.msra.mxu0 0.0
    %612 = vmatprep.subr.mxu0 0.0
    %613 = vmatpush1.msra.mxu0 0.0
    %614 = vmatprep.subr.mxu0 0.0
    %615 = vmatpush1.msra.mxu0 0.0
    %616 = vmatprep.subr.mxu0 0.0
    %617 = vmatpush1.msra.mxu0 0.0
    %618 = vmatprep.subr.mxu0 0.0
    %619 = vmatpush1.msra.mxu0 0.0
    %620 = vmatprep.subr.mxu0 0.0
    %621 = vmatpush1.msra.mxu0 0.0
    %622 = vmatprep.subr.mxu0 0.0
    %623 = vmatpush1.msra.mxu0 0.0
    %624 = vmatprep.subr.mxu0 0.0
    %625 = vmatpush1.msra.mxu0 0.0
    %626 = vmatprep.subr.mxu0 0.0
    %627 = vmatpush1.msra.mxu0 0.0
    %628 = vmatprep.subr.mxu0 0.0
    %629 = vmatpush1.msra.mxu0 0.0
    %630 = vmatprep.subr.mxu0 0.0
    %631 = vmatpush1.msra.mxu0 0.0
    %632 = vmatprep.subr.mxu0 0.0
    %633 = vmatpush1.msra.mxu0 0.0
    %634 = vmatprep.subr.mxu0 0.0
    %635 = vmatpush1.msra.mxu0 0.0
    %636 = vmatprep.subr.mxu0 0.0
    %637 = vmatpush1.msra.mxu0 0.0
    %638 = vmatprep.subr.mxu0 0.0
    %639 = vmatpush1.msra.mxu0 0.0
    %640 = vmatprep.subr.mxu0 0.0
    %641 = vmatpush1.msra.mxu0 0.0
    %642 = vmatprep.subr.mxu0 0.0
    %643 = vmatpush1.msra.mxu0 0.0
    %644 = vmatprep.mubr.f32.mxu0 0.0
    %645 = vmatmul.mubr.f32.gmra.mrb[0].mxu0 %v578
    %v646 = vpop.f32.mrb[0].mxu0
    %v647 = vadd.f32 %v575, %v646
    %v648 = vpop.f32.mrb[0].mxu0
    %v649 = vadd.f32 %v575, %v648
    %650 = vdwg.mxu0
    %v651 = vadd.f32 %v647, %v649
    %652 = vadd.xlane.f32.xlu0 %v651
    %v653 = vpop.xlane.xlu0 %652
    %v654 = vrot.slane %v653, 4
    %v655 = vadd.f32 %v653, %v654
    %v656 = vrot.slane %v655, 2
    %v657 = vadd.f32 %v655, %v656
    %v658 = vrot.slane %v657, 1
    %v659 = vadd.f32 %v657, %v658
    %v660 = vmul.f32 %v659, 0.00048828125
    %v661 = vsub.f32 %v647, %v660
    %v662 = vsub.f32 %v649, %v660
    %v663 = vmul.f32 %v661, %v661
    %v664 = vmul.f32 %v662, %v662
    %v665 = vadd.f32 %v663, %v664
    %666 = vadd.xlane.f32.xlu0 %v665
    %v667 = vpop.xlane.xlu0 %666
    %v668 = vrot.slane %v667, 4
    %v669 = vadd.f32 %v667, %v668
    %v670 = vrot.slane %v669, 2
    %v671 = vadd.f32 %v669, %v670
    %v672 = vrot.slane %v671, 1
    %v673 = vadd.f32 %v671, %v672
    %v674 = vmul.f32 %v673, 0.00048828125
    %v675 = vadd.f32 %v674, 1e-05
    %v676 = vrsqrt.pop %v675
    %v677 = vmul.f32 %v57, %v676
    %679 = vset.pattern.permute.xlu0 4
    %680 = vperm.xlu0 %679, %v677
    %v681 = vpop.permute.xlu0 %680
    %v683 = vmul.f32 %v661, %v681
    %v684 = vmul.f32 %v662, %v681
    %685 = vset.pattern.permute.xlu0 5
    %686 = vperm.xlu0 %685, %v57
    %v687 = vpop.permute.xlu0 %686
    %v689 = vadd.f32 %v683, %v687
    %v690 = vadd.f32 %v684, %v687
    %v691 = vmax.f32 %v689, 0.0
    %v692 = vmax.f32 %v690, 0.0
    %v693 = vld [vmem:[#allocation4] sm:$0xff]
    %v694 = vld [vmem:[#allocation4 + $0x8] sm:$0xff]
    %v695 = vadd.f32 %v693, %v691
    %v696 = vadd.f32 %v694, %v692
    %v697 = vmax.f32 %v695, 0.0
    %v698 = vmax.f32 %v696, 0.0
    %699 = vst [vmem:[#allocation10] sm:$0xff] %v697
    %700 = vst [vmem:[#allocation10 + $0x8] sm:$0xff] %v698
    %s701 = scalar_lea.vmem [#allocation4], 16
    %v702 = vld [vmem:[%s701] sm:$0xff]
    %v703 = vld [vmem:[%s701 + $0x8] sm:$0xff]
    %704 = vst [vmem:[#allocation2 + $0x8] sm:$0xff] %v702
    %705 = vst [vmem:[#allocation2 + $0x10] sm:$0xff] %v703
    %v706 = vld [vmem:[#allocation2] sm:$0xff]
    %v707 = vld [vmem:[#allocation2 + $0x8] sm:$0xff]
    %v708 = vld [vmem:[#allocation2 + $0x10] sm:$0xff]
    %712 = vrot.lane.b32.xlu0 %v706, 17
    %v713 = vpop.permute.xlu0 %712
    %714 = vrot.lane.b32.xlu0 %v707, 17
    %v715 = vpop.permute.xlu0 %714
    %716 = vrot.lane.b32.xlu0 %v708, 17
    %v717 = vpop.permute.xlu0 %716
    %v718 = vsel %vm97, %v713, %v715
    %v719 = vsel %vm97, %v715, %v717
    %v722 = vsel %vm75, %v718, 0.0
    %v723 = vsel %vm76, %v719, 0.0
    %724 = vst [vmem:[#allocation3] sm:$0xff] %v722
    %725 = vst [vmem:[#allocation3 + $0x8] sm:$0xff] %v723
    %v726 = vld [vmem:[#allocation2] sm:$0xff]
    %v727 = vld [vmem:[#allocation2 + $0x8] sm:$0xff]
    %v728 = vld [vmem:[#allocation2 + $0x10] sm:$0xff]
    %732 = vrot.lane.b32.xlu0 %v726, 16
    %v733 = vpop.permute.xlu0 %732
    %734 = vrot.lane.b32.xlu0 %v727, 16
    %v735 = vpop.permute.xlu0 %734
    %736 = vrot.lane.b32.xlu0 %v728, 16
    %v737 = vpop.permute.xlu0 %736
    %v738 = vsel %vm118, %v733, %v735
    %v739 = vsel %vm118, %v735, %v737
    %742 = vst [vmem:[#allocation3 + $0x10] sm:$0xff] %v738
    %743 = vst [vmem:[#allocation3 + $0x18] sm:$0xff] %v739
    %v744 = vld [vmem:[#allocation2] sm:$0xff]
    %v745 = vld [vmem:[#allocation2 + $0x8] sm:$0xff]
    %v746 = vld [vmem:[#allocation2 + $0x10] sm:$0xff]
    %750 = vrot.lane.b32.xlu0 %v744, 15
    %v751 = vpop.permute.xlu0 %750
    %752 = vrot.lane.b32.xlu0 %v745, 15
    %v753 = vpop.permute.xlu0 %752
    %754 = vrot.lane.b32.xlu0 %v746, 15
    %v755 = vpop.permute.xlu0 %754
    %v756 = vsel %vm137, %v751, %v753
    %v757 = vsel %vm137, %v753, %v755
    %v760 = vsel %vm77, %v756, 0.0
    %v761 = vsel %vm78, %v757, 0.0
    %762 = vst [vmem:[#allocation3 + $0x20] sm:$0xff] %v760
    %763 = vst [vmem:[#allocation3 + $0x28] sm:$0xff] %v761
    %v764 = vld [vmem:[#allocation2] sm:$0xff]
    %v765 = vld [vmem:[#allocation2 + $0x8] sm:$0xff]
    %v766 = vld [vmem:[#allocation2 + $0x10] sm:$0xff]
    %770 = vrot.lane.b32.xlu0 %v764, 1
    %v771 = vpop.permute.xlu0 %770
    %772 = vrot.lane.b32.xlu0 %v765, 1
    %v773 = vpop.permute.xlu0 %772
    %774 = vrot.lane.b32.xlu0 %v766, 1
    %v775 = vpop.permute.xlu0 %774
    %v776 = vsel %vm158, %v771, %v773
    %v777 = vsel %vm158, %v773, %v775
    %v780 = vsel %vm75, %v776, 0.0
    %v781 = vsel %vm76, %v777, 0.0
    %782 = vst [vmem:[#allocation3 + $0x30] sm:$0xff] %v780
    %783 = vst [vmem:[#allocation3 + $0x38] sm:$0xff] %v781
    %v784 = vld [vmem:[#allocation2 + $0x8] sm:$0xff]
    %v785 = vld [vmem:[#allocation2 + $0x10] sm:$0xff]
    %786 = vst [vmem:[#allocation3 + $0x40] sm:$0xff] %v784
    %787 = vst [vmem:[#allocation3 + $0x48] sm:$0xff] %v785
    %v788 = vld [vmem:[#allocation2 + $0x8] sm:$0xff]
    %v789 = vld [vmem:[#allocation2 + $0x10] sm:$0xff]
    %v790 = vld [vmem:[#allocation2 + $0x18] sm:$0xff]
    %794 = vrot.lane.b32.xlu0 %v788, 127
    %v795 = vpop.permute.xlu0 %794
    %796 = vrot.lane.b32.xlu0 %v789, 127
    %v797 = vpop.permute.xlu0 %796
    %798 = vrot.lane.b32.xlu0 %v790, 127
    %v799 = vpop.permute.xlu0 %798
    %v800 = vsel %vm183, %v795, %v797
    %v801 = vsel %vm183, %v797, %v799
    %v804 = vsel %vm77, %v800, 0.0
    %v805 = vsel %vm78, %v801, 0.0
    %806 = vst [vmem:[#allocation3 + $0x50] sm:$0xff] %v804
    %807 = vst [vmem:[#allocation3 + $0x58] sm:$0xff] %v805
    %v808 = vld [vmem:[#allocation2 + $0x8] sm:$0xff]
    %v809 = vld [vmem:[#allocation2 + $0x10] sm:$0xff]
    %v810 = vld [vmem:[#allocation2 + $0x18] sm:$0xff]
    %814 = vrot.lane.b32.xlu0 %v808, 113
    %v815 = vpop.permute.xlu0 %814
    %816 = vrot.lane.b32.xlu0 %v809, 113
    %v817 = vpop.permute.xlu0 %816
    %818 = vrot.lane.b32.xlu0 %v810, 113
    %v819 = vpop.permute.xlu0 %818
    %v820 = vsel %vm204, %v815, %v817
    %v821 = vsel %vm204, %v817, %v819
    %v824 = vsel %vm75, %v820, 0.0
    %v825 = vsel %vm76, %v821, 0.0
    %826 = vst [vmem:[#allocation3 + $0x60] sm:$0xff] %v824
    %827 = vst [vmem:[#allocation3 + $0x68] sm:$0xff] %v825
    %v828 = vld [vmem:[#allocation2 + $0x8] sm:$0xff]
    %v829 = vld [vmem:[#allocation2 + $0x10] sm:$0xff]
    %v830 = vld [vmem:[#allocation2 + $0x18] sm:$0xff]
    %834 = vrot.lane.b32.xlu0 %v828, 112
    %v835 = vpop.permute.xlu0 %834
    %836 = vrot.lane.b32.xlu0 %v829, 112
    %v837 = vpop.permute.xlu0 %836
    %838 = vrot.lane.b32.xlu0 %v830, 112
    %v839 = vpop.permute.xlu0 %838
    %v840 = vsel %vm225, %v835, %v837
    %v841 = vsel %vm225, %v837, %v839
    %844 = vst [vmem:[#allocation3 + $0x70] sm:$0xff] %v840
    %845 = vst [vmem:[#allocation3 + $0x78] sm:$0xff] %v841
    %v846 = vld [vmem:[#allocation2 + $0x8] sm:$0xff]
    %v847 = vld [vmem:[#allocation2 + $0x10] sm:$0xff]
    %v848 = vld [vmem:[#allocation2 + $0x18] sm:$0xff]
    %852 = vrot.lane.b32.xlu0 %v846, 111
    %v853 = vpop.permute.xlu0 %852
    %854 = vrot.lane.b32.xlu0 %v847, 111
    %v855 = vpop.permute.xlu0 %854
    %856 = vrot.lane.b32.xlu0 %v848, 111
    %v857 = vpop.permute.xlu0 %856
    %v858 = vsel %vm244, %v853, %v855
    %v859 = vsel %vm244, %v855, %v857
    %v862 = vsel %vm77, %v858, 0.0
    %v863 = vsel %vm78, %v859, 0.0
    %864 = vst [vmem:[#allocation3 + $0x80] sm:$0xff] %v862
    %865 = vst [vmem:[#allocation3 + $0x88] sm:$0xff] %v863
    %v866 = vld [vmem:[#allocation3] sm:$0xff]
    %v867 = vld [vmem:[#allocation3 + $0x8] sm:$0xff]
    %v868 = vld [vmem:[#allocation3 + $0x10] sm:$0xff]
    %v869 = vld [vmem:[#allocation3 + $0x18] sm:$0xff]
    %v870 = vld [vmem:[#allocation3 + $0x20] sm:$0xff]
    %v871 = vld [vmem:[#allocation3 + $0x28] sm:$0xff]
    %v872 = vld [vmem:[#allocation3 + $0x30] sm:$0xff]
    %v873 = vld [vmem:[#allocation3 + $0x38] sm:$0xff]
    %v874 = vld [vmem:[#allocation3 + $0x40] sm:$0xff]
    %v875 = vld [vmem:[#allocation3 + $0x48] sm:$0xff]
    %v876 = vld [vmem:[#allocation3 + $0x50] sm:$0xff]
    %v877 = vld [vmem:[#allocation3 + $0x58] sm:$0xff]
    %v878 = vld [vmem:[#allocation3 + $0x60] sm:$0xff]
    %v879 = vld [vmem:[#allocation3 + $0x68] sm:$0xff]
    %v880 = vld [vmem:[#allocation3 + $0x70] sm:$0xff]
    %v881 = vld [vmem:[#allocation3 + $0x78] sm:$0xff]
    %v882 = vld [vmem:[#allocation3 + $0x80] sm:$0xff]
    %v883 = vld [vmem:[#allocation3 + $0x88] sm:$0xff]
    %884 = vmatprep.subr.mxu0 %v867
    %885 = vmatpush1.msra.mxu0 %v866
    %886 = vmatprep.subr.mxu0 %v869
    %887 = vmatpush1.msra.mxu0 %v868
    %888 = vmatprep.subr.mxu0 %v871
    %889 = vmatpush1.msra.mxu0 %v870
    %890 = vmatprep.subr.mxu0 %v873
    %891 = vmatpush1.msra.mxu0 %v872
    %892 = vmatprep.subr.mxu0 %v875
    %893 = vmatpush1.msra.mxu0 %v874
    %894 = vmatprep.subr.mxu0 %v877
    %895 = vmatpush1.msra.mxu0 %v876
    %896 = vmatprep.subr.mxu0 %v879
    %897 = vmatpush1.msra.mxu0 %v878
    %898 = vmatprep.subr.mxu0 %v881
    %899 = vmatpush1.msra.mxu0 %v880
    %900 = vmatprep.subr.mxu0 %v883
    %901 = vmatpush1.msra.mxu0 %v882
    %902 = vmatprep.subr.mxu0 0.0
    %903 = vmatpush1.msra.mxu0 0.0
    %904 = vmatprep.subr.mxu0 0.0
    %905 = vmatpush1.msra.mxu0 0.0
    %906 = vmatprep.subr.mxu0 0.0
    %907 = vmatpush1.msra.mxu0 0.0
    %908 = vmatprep.subr.mxu0 0.0
    %909 = vmatpush1.msra.mxu0 0.0
    %910 = vmatprep.subr.mxu0 0.0
    %911 = vmatpush1.msra.mxu0 0.0
    %912 = vmatprep.subr.mxu0 0.0
    %913 = vmatpush1.msra.mxu0 0.0
    %914 = vmatprep.subr.mxu0 0.0
    %915 = vmatpush1.msra.mxu0 0.0
    %916 = vmatprep.subr.mxu0 0.0
    %917 = vmatpush1.msra.mxu0 0.0
    %918 = vmatprep.subr.mxu0 0.0
    %919 = vmatpush1.msra.mxu0 0.0
    %920 = vmatprep.subr.mxu0 0.0
    %921 = vmatpush1.msra.mxu0 0.0
    %922 = vmatprep.subr.mxu0 0.0
    %923 = vmatpush1.msra.mxu0 0.0
    %924 = vmatprep.subr.mxu0 0.0
    %925 = vmatpush1.msra.mxu0 0.0
    %926 = vmatprep.subr.mxu0 0.0
    %927 = vmatpush1.msra.mxu0 0.0
    %928 = vmatprep.subr.mxu0 0.0
    %929 = vmatpush1.msra.mxu0 0.0
    %930 = vmatprep.subr.mxu0 0.0
    %931 = vmatpush1.msra.mxu0 0.0
    %932 = vmatprep.subr.mxu0 0.0
    %933 = vmatpush1.msra.mxu0 0.0
    %934 = vmatprep.subr.mxu0 0.0
    %935 = vmatpush1.msra.mxu0 0.0
    %936 = vmatprep.subr.mxu0 0.0
    %937 = vmatpush1.msra.mxu0 0.0
    %938 = vmatprep.subr.mxu0 0.0
    %939 = vmatpush1.msra.mxu0 0.0
    %940 = vmatprep.subr.mxu0 0.0
    %941 = vmatpush1.msra.mxu0 0.0
    %942 = vmatprep.subr.mxu0 0.0
    %943 = vmatpush1.msra.mxu0 0.0
    %944 = vmatprep.subr.mxu0 0.0
    %945 = vmatpush1.msra.mxu0 0.0
    %946 = vmatprep.subr.mxu0 0.0
    %947 = vmatpush1.msra.mxu0 0.0
    %948 = vmatprep.mubr.f32.mxu0 0.0
    %949 = vmatmul.mubr.f32.gmra.mrb[0].mxu0 %v278
    %v950 = vpop.f32.mrb[0].mxu0
    %v951 = vadd.f32 %v274, %v950
    %v952 = vpop.f32.mrb[0].mxu0
    %v953 = vadd.f32 %v274, %v952
    %954 = vdwg.mxu0
    %v955 = vadd.f32 %v951, %v953
    %956 = vadd.xlane.f32.xlu0 %v955
    %v957 = vpop.xlane.xlu0 %956
    %v958 = vrot.slane %v957, 4
    %v959 = vadd.f32 %v957, %v958
    %v960 = vrot.slane %v959, 2
    %v961 = vadd.f32 %v959, %v960
    %v962 = vrot.slane %v961, 1
    %v963 = vadd.f32 %v961, %v962
    %v964 = vmul.f32 %v963, 0.00048828125
    %v965 = vsub.f32 %v951, %v964
    %v966 = vsub.f32 %v953, %v964
    %v967 = vmul.f32 %v965, %v965
    %v968 = vmul.f32 %v966, %v966
    %v969 = vadd.f32 %v967, %v968
    %970 = vadd.xlane.f32.xlu0 %v969
    %v971 = vpop.xlane.xlu0 %970
    %v972 = vrot.slane %v971, 4
    %v973 = vadd.f32 %v971, %v972
    %v974 = vrot.slane %v973, 2
    %v975 = vadd.f32 %v973, %v974
    %v976 = vrot.slane %v975, 1
    %v977 = vadd.f32 %v975, %v976
    %v978 = vmul.f32 %v977, 0.00048828125
    %v979 = vadd.f32 %v978, 1e-05
    %v980 = vrsqrt.pop %v979
    %v981 = vmul.f32 %v57, %v980
    %983 = vset.pattern.permute.xlu0 1
    %984 = vperm.xlu0 %983, %v981
    %v985 = vpop.permute.xlu0 %984
    %v987 = vmul.f32 %v965, %v985
    %v988 = vmul.f32 %v966, %v985
    %v989 = vadd.f32 %v987, %v387
    %v990 = vadd.f32 %v988, %v387
    %v991 = vmax.f32 %v989, 0.0
    %v992 = vmax.f32 %v990, 0.0
    %993 = vst [vmem:[#allocation2 + $0x8] sm:$0xff] %v991
    %994 = vst [vmem:[#allocation2 + $0x10] sm:$0xff] %v992
    %v995 = vld [vmem:[#allocation2] sm:$0xff]
    %v996 = vld [vmem:[#allocation2 + $0x8] sm:$0xff]
    %v997 = vld [vmem:[#allocation2 + $0x10] sm:$0xff]
    %1001 = vrot.lane.b32.xlu0 %v995, 17
    %v1002 = vpop.permute.xlu0 %1001
    %1003 = vrot.lane.b32.xlu0 %v996, 17
    %v1004 = vpop.permute.xlu0 %1003
    %1005 = vrot.lane.b32.xlu0 %v997, 17
    %v1006 = vpop.permute.xlu0 %1005
    %v1007 = vsel %vm97, %v1002, %v1004
    %v1008 = vsel %vm97, %v1004, %v1006
    %v1011 = vsel %vm75, %v1007, 0.0
    %v1012 = vsel %vm76, %v1008, 0.0
    %1013 = vst [vmem:[#allocation3] sm:$0xff] %v1011
    %1014 = vst [vmem:[#allocation3 + $0x8] sm:$0xff] %v1012
    %v1015 = vld [vmem:[#allocation2] sm:$0xff]
    %v1016 = vld [vmem:[#allocation2 + $0x8] sm:$0xff]
    %v1017 = vld [vmem:[#allocation2 + $0x10] sm:$0xff]
    %1021 = vrot.lane.b32.xlu0 %v1015, 16
    %v1022 = vpop.permute.xlu0 %1021
    %1023 = vrot.lane.b32.xlu0 %v1016, 16
    %v1024 = vpop.permute.xlu0 %1023
    %1025 = vrot.lane.b32.xlu0 %v1017, 16
    %v1026 = vpop.permute.xlu0 %1025
    %v1027 = vsel %vm118, %v1022, %v1024
    %v1028 = vsel %vm118, %v1024, %v1026
    %1031 = vst [vmem:[#allocation3 + $0x10] sm:$0xff] %v1027
    %1032 = vst [vmem:[#allocation3 + $0x18] sm:$0xff] %v1028
    %v1033 = vld [vmem:[#allocation2] sm:$0xff]
    %v1034 = vld [vmem:[#allocation2 + $0x8] sm:$0xff]
    %v1035 = vld [vmem:[#allocation2 + $0x10] sm:$0xff]
    %1039 = vrot.lane.b32.xlu0 %v1033, 15
    %v1040 = vpop.permute.xlu0 %1039
    %1041 = vrot.lane.b32.xlu0 %v1034, 15
    %v1042 = vpop.permute.xlu0 %1041
    %1043 = vrot.lane.b32.xlu0 %v1035, 15
    %v1044 = vpop.permute.xlu0 %1043
    %v1045 = vsel %vm137, %v1040, %v1042
    %v1046 = vsel %vm137, %v1042, %v1044
    %v1049 = vsel %vm77, %v1045, 0.0
    %v1050 = vsel %vm78, %v1046, 0.0
    %1051 = vst [vmem:[#allocation3 + $0x20] sm:$0xff] %v1049
    %1052 = vst [vmem:[#allocation3 + $0x28] sm:$0xff] %v1050
    %v1053 = vld [vmem:[#allocation2] sm:$0xff]
    %v1054 = vld [vmem:[#allocation2 + $0x8] sm:$0xff]
    %v1055 = vld [vmem:[#allocation2 + $0x10] sm:$0xff]
    %1059 = vrot.lane.b32.xlu0 %v1053, 1
    %v1060 = vpop.permute.xlu0 %1059
    %1061 = vrot.lane.b32.xlu0 %v1054, 1
    %v1062 = vpop.permute.xlu0 %1061
    %1063 = vrot.lane.b32.xlu0 %v1055, 1
    %v1064 = vpop.permute.xlu0 %1063
    %v1065 = vsel %vm158, %v1060, %v1062
    %v1066 = vsel %vm158, %v1062, %v1064
    %v1069 = vsel %vm75, %v1065, 0.0
    %v1070 = vsel %vm76, %v1066, 0.0
    %1071 = vst [vmem:[#allocation3 + $0x30] sm:$0xff] %v1069
    %1072 = vst [vmem:[#allocation3 + $0x38] sm:$0xff] %v1070
    %v1073 = vld [vmem:[#allocation2 + $0x8] sm:$0xff]
    %v1074 = vld [vmem:[#allocation2 + $0x10] sm:$0xff]
    %1075 = vst [vmem:[#allocation3 + $0x40] sm:$0xff] %v1073
    %1076 = vst [vmem:[#allocation3 + $0x48] sm:$0xff] %v1074
    %v1077 = vld [vmem:[#allocation2 + $0x8] sm:$0xff]
    %v1078 = vld [vmem:[#allocation2 + $0x10] sm:$0xff]
    %v1079 = vld [vmem:[#allocation2 + $0x18] sm:$0xff]
    %1083 = vrot.lane.b32.xlu0 %v1077, 127
    %v1084 = vpop.permute.xlu0 %1083
    %1085 = vrot.lane.b32.xlu0 %v1078, 127
    %v1086 = vpop.permute.xlu0 %1085
    %1087 = vrot.lane.b32.xlu0 %v1079, 127
    %v1088 = vpop.permute.xlu0 %1087
    %v1089 = vsel %vm183, %v1084, %v1086
    %v1090 = vsel %vm183, %v1086, %v1088
    %v1093 = vsel %vm77, %v1089, 0.0
    %v1094 = vsel %vm78, %v1090, 0.0
    %1095 = vst [vmem:[#allocation3 + $0x50] sm:$0xff] %v1093
    %1096 = vst [vmem:[#allocation3 + $0x58] sm:$0xff] %v1094
    %v1097 = vld [vmem:[#allocation2 + $0x8] sm:$0xff]
    %v1098 = vld [vmem:[#allocation2 + $0x10] sm:$0xff]
    %v1099 = vld [vmem:[#allocation2 + $0x18] sm:$0xff]
    %1103 = vrot.lane.b32.xlu0 %v1097, 113
    %v1104 = vpop.permute.xlu0 %1103
    %1105 = vrot.lane.b32.xlu0 %v1098, 113
    %v1106 = vpop.permute.xlu0 %1105
    %1107 = vrot.lane.b32.xlu0 %v1099, 113
    %v1108 = vpop.permute.xlu0 %1107
    %v1109 = vsel %vm204, %v1104, %v1106
    %v1110 = vsel %vm204, %v1106, %v1108
    %v1113 = vsel %vm75, %v1109, 0.0
    %v1114 = vsel %vm76, %v1110, 0.0
    %1115 = vst [vmem:[#allocation3 + $0x60] sm:$0xff] %v1113
    %1116 = vst [vmem:[#allocation3 + $0x68] sm:$0xff] %v1114
    %v1117 = vld [vmem:[#allocation2 + $0x8] sm:$0xff]
    %v1118 = vld [vmem:[#allocation2 + $0x10] sm:$0xff]
    %v1119 = vld [vmem:[#allocation2 + $0x18] sm:$0xff]
    %1123 = vrot.lane.b32.xlu0 %v1117, 112
    %v1124 = vpop.permute.xlu0 %1123
    %1125 = vrot.lane.b32.xlu0 %v1118, 112
    %v1126 = vpop.permute.xlu0 %1125
    %1127 = vrot.lane.b32.xlu0 %v1119, 112
    %v1128 = vpop.permute.xlu0 %1127
    %v1129 = vsel %vm225, %v1124, %v1126
    %v1130 = vsel %vm225, %v1126, %v1128
    %1133 = vst [vmem:[#allocation3 + $0x70] sm:$0xff] %v1129
    %1134 = vst [vmem:[#allocation3 + $0x78] sm:$0xff] %v1130
    %v1135 = vld [vmem:[#allocation2 + $0x8] sm:$0xff]
    %v1136 = vld [vmem:[#allocation2 + $0x10] sm:$0xff]
    %v1137 = vld [vmem:[#allocation2 + $0x18] sm:$0xff]
    %1141 = vrot.lane.b32.xlu0 %v1135, 111
    %v1142 = vpop.permute.xlu0 %1141
    %1143 = vrot.lane.b32.xlu0 %v1136, 111
    %v1144 = vpop.permute.xlu0 %1143
    %1145 = vrot.lane.b32.xlu0 %v1137, 111
    %v1146 = vpop.permute.xlu0 %1145
    %v1147 = vsel %vm244, %v1142, %v1144
    %v1148 = vsel %vm244, %v1144, %v1146
    %v1151 = vsel %vm77, %v1147, 0.0
    %v1152 = vsel %vm78, %v1148, 0.0
    %1153 = vst [vmem:[#allocation3 + $0x80] sm:$0xff] %v1151
    %1154 = vst [vmem:[#allocation3 + $0x88] sm:$0xff] %v1152
    %v1155 = vld [vmem:[#allocation3] sm:$0xff]
    %v1156 = vld [vmem:[#allocation3 + $0x8] sm:$0xff]
    %v1157 = vld [vmem:[#allocation3 + $0x10] sm:$0xff]
    %v1158 = vld [vmem:[#allocation3 + $0x18] sm:$0xff]
    %v1159 = vld [vmem:[#allocation3 + $0x20] sm:$0xff]
    %v1160 = vld [vmem:[#allocation3 + $0x28] sm:$0xff]
    %v1161 = vld [vmem:[#allocation3 + $0x30] sm:$0xff]
    %v1162 = vld [vmem:[#allocation3 + $0x38] sm:$0xff]
    %v1163 = vld [vmem:[#allocation3 + $0x40] sm:$0xff]
    %v1164 = vld [vmem:[#allocation3 + $0x48] sm:$0xff]
    %v1165 = vld [vmem:[#allocation3 + $0x50] sm:$0xff]
    %v1166 = vld [vmem:[#allocation3 + $0x58] sm:$0xff]
    %v1167 = vld [vmem:[#allocation3 + $0x60] sm:$0xff]
    %v1168 = vld [vmem:[#allocation3 + $0x68] sm:$0xff]
    %v1169 = vld [vmem:[#allocation3 + $0x70] sm:$0xff]
    %v1170 = vld [vmem:[#allocation3 + $0x78] sm:$0xff]
    %v1171 = vld [vmem:[#allocation3 + $0x80] sm:$0xff]
    %v1172 = vld [vmem:[#allocation3 + $0x88] sm:$0xff]
    %1173 = vmatprep.subr.mxu0 %v1156
    %1174 = vmatpush1.msra.mxu0 %v1155
    %1175 = vmatprep.subr.mxu0 %v1158
    %1176 = vmatpush1.msra.mxu0 %v1157
    %1177 = vmatprep.subr.mxu0 %v1160
    %1178 = vmatpush1.msra.mxu0 %v1159
    %1179 = vmatprep.subr.mxu0 %v1162
    %1180 = vmatpush1.msra.mxu0 %v1161
    %1181 = vmatprep.subr.mxu0 %v1164
    %1182 = vmatpush1.msra.mxu0 %v1163
    %1183 = vmatprep.subr.mxu0 %v1166
    %1184 = vmatpush1.msra.mxu0 %v1165
    %1185 = vmatprep.subr.mxu0 %v1168
    %1186 = vmatpush1.msra.mxu0 %v1167
    %1187 = vmatprep.subr.mxu0 %v1170
    %1188 = vmatpush1.msra.mxu0 %v1169
    %1189 = vmatprep.subr.mxu0 %v1172
    %1190 = vmatpush1.msra.mxu0 %v1171
    %1191 = vmatprep.subr.mxu0 0.0
    %1192 = vmatpush1.msra.mxu0 0.0
    %1193 = vmatprep.subr.mxu0 0.0
    %1194 = vmatpush1.msra.mxu0 0.0
    %1195 = vmatprep.subr.mxu0 0.0
    %1196 = vmatpush1.msra.mxu0 0.0
    %1197 = vmatprep.subr.mxu0 0.0
    %1198 = vmatpush1.msra.mxu0 0.0
    %1199 = vmatprep.subr.mxu0 0.0
    %1200 = vmatpush1.msra.mxu0 0.0
    %1201 = vmatprep.subr.mxu0 0.0
    %1202 = vmatpush1.msra.mxu0 0.0
    %1203 = vmatprep.subr.mxu0 0.0
    %1204 = vmatpush1.msra.mxu0 0.0
    %1205 = vmatprep.subr.mxu0 0.0
    %1206 = vmatpush1.msra.mxu0 0.0
    %1207 = vmatprep.subr.mxu0 0.0
    %1208 = vmatpush1.msra.mxu0 0.0
    %1209 = vmatprep.subr.mxu0 0.0
    %1210 = vmatpush1.msra.mxu0 0.0
    %1211 = vmatprep.subr.mxu0 0.0
    %1212 = vmatpush1.msra.mxu0 0.0
    %1213 = vmatprep.subr.mxu0 0.0
    %1214 = vmatpush1.msra.mxu0 0.0
    %1215 = vmatprep.subr.mxu0 0.0
    %1216 = vmatpush1.msra.mxu0 0.0
    %1217 = vmatprep.subr.mxu0 0.0
    %1218 = vmatpush1.msra.mxu0 0.0
    %1219 = vmatprep.subr.mxu0 0.0
    %1220 = vmatpush1.msra.mxu0 0.0
    %1221 = vmatprep.subr.mxu0 0.0
    %1222 = vmatpush1.msra.mxu0 0.0
    %1223 = vmatprep.subr.mxu0 0.0
    %1224 = vmatpush1.msra.mxu0 0.0
    %1225 = vmatprep.subr.mxu0 0.0
    %1226 = vmatpush1.msra.mxu0 0.0
    %1227 = vmatprep.subr.mxu0 0.0
    %1228 = vmatpush1.msra.mxu0 0.0
    %1229 = vmatprep.subr.mxu0 0.0
    %1230 = vmatpush1.msra.mxu0 0.0
    %1231 = vmatprep.subr.mxu0 0.0
    %1232 = vmatpush1.msra.mxu0 0.0
    %1233 = vmatprep.subr.mxu0 0.0
    %1234 = vmatpush1.msra.mxu0 0.0
    %1235 = vmatprep.subr.mxu0 0.0
    %1236 = vmatpush1.msra.mxu0 0.0
    %1237 = vmatprep.mubr.f32.mxu0 0.0
    %1238 = vmatmul.mubr.f32.gmra.mrb[0].mxu0 %v578
    %v1239 = vpop.f32.mrb[0].mxu0
    %v1240 = vadd.f32 %v575, %v1239
    %v1241 = vpop.f32.mrb[0].mxu0
    %v1242 = vadd.f32 %v575, %v1241
    %1243 = vdwg.mxu0
    %v1244 = vadd.f32 %v1240, %v1242
    %1245 = vadd.xlane.f32.xlu0 %v1244
    %v1246 = vpop.xlane.xlu0 %1245
    %v1247 = vrot.slane %v1246, 4
    %v1248 = vadd.f32 %v1246, %v1247
    %v1249 = vrot.slane %v1248, 2
    %v1250 = vadd.f32 %v1248, %v1249
    %v1251 = vrot.slane %v1250, 1
    %v1252 = vadd.f32 %v1250, %v1251
    %v1253 = vmul.f32 %v1252, 0.00048828125
    %v1254 = vsub.f32 %v1240, %v1253
    %v1255 = vsub.f32 %v1242, %v1253
    %v1256 = vmul.f32 %v1254, %v1254
    %v1257 = vmul.f32 %v1255, %v1255
    %v1258 = vadd.f32 %v1256, %v1257
    %1259 = vadd.xlane.f32.xlu0 %v1258
    %v1260 = vpop.xlane.xlu0 %1259
    %v1261 = vrot.slane %v1260, 4
    %v1262 = vadd.f32 %v1260, %v1261
    %v1263 = vrot.slane %v1262, 2
    %v1264 = vadd.f32 %v1262, %v1263
    %v1265 = vrot.slane %v1264, 1
    %v1266 = vadd.f32 %v1264, %v1265
    %v1267 = vmul.f32 %v1266, 0.00048828125
    %v1268 = vadd.f32 %v1267, 1e-05
    %v1269 = vrsqrt.pop %v1268
    %v1270 = vmul.f32 %v57, %v1269
    %1272 = vset.pattern.permute.xlu0 4
    %1273 = vperm.xlu0 %1272, %v1270
    %v1274 = vpop.permute.xlu0 %1273
    %v1276 = vmul.f32 %v1254, %v1274
    %v1277 = vmul.f32 %v1255, %v1274
    %v1278 = vadd.f32 %v1276, %v687
    %v1279 = vadd.f32 %v1277, %v687
    %v1280 = vmax.f32 %v1278, 0.0
    %v1281 = vmax.f32 %v1279, 0.0
    %v1282 = vld [vmem:[%s701] sm:$0xff]
    %v1283 = vld [vmem:[%s701 + $0x8] sm:$0xff]
    %v1284 = vadd.f32 %v1282, %v1280
    %v1285 = vadd.f32 %v1283, %v1281
    %v1286 = vmax.f32 %v1284, 0.0
    %v1287 = vmax.f32 %v1285, 0.0
    %s1288 = scalar_lea.vmem [#allocation10], 16
    %1289 = vst [vmem:[%s1288] sm:$0xff] %v1286
    %1290 = vst [vmem:[%s1288 + $0x8] sm:$0xff] %v1287
    // Predicated region
    $region26: #{tpu_custom_call.1} parent=1 // pred_check
      _
    $region27: #{tpu_custom_call.1} parent=1 // pred_check_branch
      %1292 = sbr.rel (0) target = $region29
    $region28: #{tpu_custom_call.1} parent=1 // pred_region
      %s1294 = ssub.s32 512, 512
      %1295 = vsyncadd [#allocation6], %s1294
      %s1296 = sshll.u32 [#allocation10], 4
      %s1297 = int_to_ptr.vmem [resolvable:$true] %s1296
      %1302 = dma.vmem_to_hbm [thread:$0]  %s1297, 512, %s3, [#allocation6], 256, 256, 16
    $region29: #{tpu_custom_call.1} parent=1 // pred_fallthru
      _
    // Predicated region
    $region30: #{tpu_custom_call.1} parent=1 // pred_check
      _
    $region31: #{tpu_custom_call.1} parent=1 // pred_check_branch
      %1304 = sbr.rel (0) target = $region33
    $region32: #{tpu_custom_call.1} parent=1 // pred_region
      %1305 = dma.done [#allocation6], 512
    $region33: #{tpu_custom_call.1} parent=1 // pred_fallthru
      _
    %1306 = vsyncpa [#allocation5], 1
    %1307 = vsyncpa [#allocation8], 1
    %1308 = vsyncpa [#allocation6], 1

</llo_original>
